<compile_context>
chip_gen: v5e
topology: v5e:2x2
jax: 0.10.0
libtpu: 0.0.40
codegen_flags: <defaults>
</compile_context>

<pallas_src>
import math

import jax
import jax.numpy as jnp
from jax.experimental import pallas as pl
from jax.experimental.pallas import tpu as pltpu


# Fixed LeNet geometry (3x32x32 input, as implied by fc1 = Linear(16*5*5, 120)).
CIN, H0, W0 = 3, 32, 32
C1, K = 6, 5
OH1, OW1 = H0 - K + 1, W0 - K + 1          # 28, 28
PH1, PW1 = OH1 // 2, OW1 // 2              # 14, 14
C2 = 16
OH2, OW2 = PH1 - K + 1, PW1 - K + 1        # 10, 10
PH2, PW2 = OH2 // 2, OW2 // 2              # 5, 5
FC1, FC2, FC3 = 120, 84, 10
FCPAD = 128                                # lane-dense FC width


# ----------------------------------------------------------------------------
# Fused kernel: one grid step == one batch sample, everything VMEM-resident.
# ----------------------------------------------------------------------------
def _lenet_kernel(xw_ref,
                  c1we_ref, c1wo_ref, c1b_ref,
                  c2we_ref, c2wo_ref, c2b_ref,
                  f1w_ref, f1b_ref, f2w_ref, f2b_ref, f3w_ref, f3b_ref,
                  o_ref,
                  s1e, s1o, s2e, s2o):
    f32 = jnp.float32
    x2d = xw_ref[0]                                        # (32, 96) = (H, Cin*W)

    # ---- conv1 + bias + ReLU (even / odd output columns), MXU matmuls --------
    ae = jnp.zeros((OH1, C1 * PW1), f32)                   # (28, 84)
    ao = jnp.zeros((OH1, C1 * PW1), f32)
    for kh in range(K):
        rows = x2d[kh:kh + OH1, :]                         # (28, 96)
        ae = ae + jnp.dot(rows, c1we_ref[kh], preferred_element_type=f32)
        ao = ao + jnp.dot(rows, c1wo_ref[kh], preferred_element_type=f32)
    s1e[...] = jnp.maximum(ae + c1b_ref[...], 0.0)
    s1o[...] = jnp.maximum(ao + c1b_ref[...], 0.0)

    # ---- maxpool1 2x2: W handled by the even/odd split, H via stride-2 reads -
    p1 = jnp.maximum(
        jnp.maximum(s1e[pl.ds(0, PH1, stride=2), :], s1e[pl.ds(1, PH1, stride=2), :]),
        jnp.maximum(s1o[pl.ds(0, PH1, stride=2), :], s1o[pl.ds(1, PH1, stride=2), :]))
    # p1: (14, 84), layout [oh, c1*14 + ow]

    # ---- conv2 + bias + ReLU (same even/odd banded-matmul trick) -------------
    be = jnp.zeros((OH2, C2 * PW2), f32)                   # (10, 80)
    bo = jnp.zeros((OH2, C2 * PW2), f32)
    for kh in range(K):
        rows = p1[kh:kh + OH2, :]                          # (10, 84)
        be = be + jnp.dot(rows, c2we_ref[kh], preferred_element_type=f32)
        bo = bo + jnp.dot(rows, c2wo_ref[kh], preferred_element_type=f32)
    s2e[...] = jnp.maximum(be + c2b_ref[...], 0.0)
    s2o[...] = jnp.maximum(bo + c2b_ref[...], 0.0)

    # ---- maxpool2 2x2 --------------------------------------------------------
    p2 = jnp.maximum(
        jnp.maximum(s2e[pl.ds(0, PH2, stride=2), :], s2e[pl.ds(1, PH2, stride=2), :]),
        jnp.maximum(s2o[pl.ds(0, PH2, stride=2), :], s2o[pl.ds(1, PH2, stride=2), :]))
    # p2: (5, 80), layout [oh, c2*5 + ow]  (flatten order absorbed into f1w)

    # ---- fc1 (+ReLU): contract (row, lane) via 5 row-vector MXU matmuls ------
    h = f1b_ref[...]                                       # (1, 128)
    for r in range(PH2):
        h = h + jnp.dot(p2[r:r + 1, :], f1w_ref[r], preferred_element_type=f32)
    h = jnp.maximum(h, 0.0)

    # ---- fc2 (+ReLU) and fc3: lane-dense 128-wide MXU passes -----------------
    h = jnp.maximum(jnp.dot(h, f2w_ref[...], preferred_element_type=f32)
                    + f2b_ref[...], 0.0)
    out = jnp.dot(h, f3w_ref[...], preferred_element_type=f32) + f3b_ref[...]
    o_ref[...] = out[None]                                 # (1, 1, 128); cols >= 10 are 0


# ----------------------------------------------------------------------------
# Host-side, one-time weight preparation (band matrices, transposes, padding).
# ----------------------------------------------------------------------------
def _band(w, w_in, ow_half, phase):
    """Banded matmul form of a valid conv along W restricted to output columns
    ow = 2*v + phase:
      B[kh, ci*w_in + x, co*ow_half + v] = w[co, ci, kh, x - 2v - phase]
    when 0 <= x - 2v - phase < KW, else 0."""
    cout, cin, kh, kw = w.shape
    sel = (jnp.arange(w_in)[None, :, None] ==
           (jnp.arange(kw)[:, None, None]
            + 2 * jnp.arange(ow_half)[None, None, :] + phase)).astype(w.dtype)
    band = jnp.einsum("ochk,kwv->hcwov", w, sel)           # (KH, Cin, W_in, Cout, OW/2)
    return band.reshape(kh, cin * w_in, cout * ow_half)


def prepare_params(p):
    f32 = jnp.float32
    w1 = p["conv1_w"].astype(f32)
    w2 = p["conv2_w"].astype(f32)

    c1we = _band(w1, W0, PW1, 0)                           # (5, 96, 84)
    c1wo = _band(w1, W0, PW1, 1)
    c1b = jnp.repeat(p["conv1_b"].astype(f32), PW1)[None, :]          # (1, 84)

    c2we = _band(w2, PW1, PW2, 0)                          # (5, 84, 80)
    c2wo = _band(w2, PW1, PW2, 1)
    c2b = jnp.repeat(p["conv2_b"].astype(f32), PW2)[None, :]          # (1, 80)

    # fc1 reads p2 (rows = pooled H, lanes = c2*5 + pooled W); torch flatten
    # order is c*25 + h*5 + w, so expand per-row and pad dout to 128 lanes.
    f1 = p["fc1_w"].astype(f32).reshape(FC1, C2, PH2, PW2)
    f1 = jnp.transpose(f1, (2, 1, 3, 0)).reshape(PH2, C2 * PW2, FC1)  # (5, 80, 120)
    f1w = jnp.pad(f1, ((0, 0), (0, 0), (0, FCPAD - FC1)))             # (5, 80, 128)
    f1b = jnp.pad(p["fc1_b"].astype(f32), (0, FCPAD - FC1))[None, :]

    f2w = jnp.pad(p["fc2_w"].astype(f32).T, ((0, FCPAD - FC1), (0, FCPAD - FC2)))
    f2b = jnp.pad(p["fc2_b"].astype(f32), (0, FCPAD - FC2))[None, :]
    f3w = jnp.pad(p["fc3_w"].astype(f32).T, ((0, FCPAD - FC2), (0, FCPAD - FC3)))
    f3b = jnp.pad(p["fc3_b"].astype(f32), (0, FCPAD - FC3))[None, :]

    return dict(c1we=c1we, c1wo=c1wo, c1b=c1b, c2we=c2we, c2wo=c2wo, c2b=c2b,
                f1w=f1w, f1b=f1b, f2w=f2w, f2b=f2b, f3w=f3w, f3b=f3b)


# ----------------------------------------------------------------------------
# Forward pass: one fused pallas_call.
# ----------------------------------------------------------------------------
def net_forward(prepped, x):
    n = x.shape[0]
    # Present the input as (N, H, Cin*W) so conv rows are a single VMEM slab.
    xw = jnp.transpose(x, (0, 2, 1, 3)).reshape(n, H0, CIN * W0)

    def full(shape):
        return pl.BlockSpec(shape, lambda *_: (0,) * len(shape))

    out = pl.pallas_call(
        _lenet_kernel,
        out_shape=jax.ShapeDtypeStruct((n, 1, FCPAD), jnp.float32),
        grid=(n,),
        in_specs=[
            pl.BlockSpec((1, H0, CIN * W0), lambda i: (i, 0, 0)),
            full((K, CIN * W0, C1 * PW1)),
            full((K, CIN * W0, C1 * PW1)),
            full((1, C1 * PW1)),
            full((K, C1 * PW1, C2 * PW2)),
            full((K, C1 * PW1, C2 * PW2)),
            full((1, C2 * PW2)),
            full((PH2, C2 * PW2, FCPAD)),
            full((1, FCPAD)),
            full((FCPAD, FCPAD)),
            full((1, FCPAD)),
            full((FCPAD, FCPAD)),
            full((1, FCPAD)),
        ],
        out_specs=pl.BlockSpec((1, 1, FCPAD), lambda i: (i, 0, 0)),
        scratch_shapes=[
            pltpu.VMEM((OH1, C1 * PW1), jnp.float32),
            pltpu.VMEM((OH1, C1 * PW1), jnp.float32),
            pltpu.VMEM((OH2, C2 * PW2), jnp.float32),
            pltpu.VMEM((OH2, C2 * PW2), jnp.float32),
        ],
        compiler_params=pltpu.CompilerParams(
            dimension_semantics=("parallel",)),
    )(xw, prepped["c1we"], prepped["c1wo"], prepped["c1b"],
      prepped["c2we"], prepped["c2wo"], prepped["c2b"],
      prepped["f1w"], prepped["f1b"], prepped["f2w"], prepped["f2b"],
      prepped["f3w"], prepped["f3b"])
    return out[:, 0, :FC3]


# ----------------------------------------------------------------------------
# Reference (pure JAX) + params + driver.
# ----------------------------------------------------------------------------
def reference_forward(p, x):
    dn = ("NCHW", "OIHW", "NCHW")
    y = jax.lax.conv_general_dilated(x, p["conv1_w"], (1, 1), "VALID",
                                     dimension_numbers=dn)
    y = jnp.maximum(y + p["conv1_b"][None, :, None, None], 0.0)
    y = jax.lax.reduce_window(y, -jnp.inf, jax.lax.max,
                              (1, 1, 2, 2), (1, 1, 2, 2), "VALID")
    y = jax.lax.conv_general_dilated(y, p["conv2_w"], (1, 1), "VALID",
                                     dimension_numbers=dn)
    y = jnp.maximum(y + p["conv2_b"][None, :, None, None], 0.0)
    y = jax.lax.reduce_window(y, -jnp.inf, jax.lax.max,
                              (1, 1, 2, 2), (1, 1, 2, 2), "VALID")
    y = y.reshape(y.shape[0], -1)
    y = jnp.maximum(y @ p["fc1_w"].T + p["fc1_b"], 0.0)
    y = jnp.maximum(y @ p["fc2_w"].T + p["fc2_b"], 0.0)
    return y @ p["fc3_w"].T + p["fc3_b"]


def init_params(key):
    # Deterministic synthetic weights mirroring PyTorch default U(-1/sqrt(fan_in), ...).
    def u(k, shape, fan_in):
        bound = 1.0 / math.sqrt(fan_in)
        return jax.random.uniform(k, shape, jnp.float32, -bound, bound)

    ks = jax.random.split(key, 10)
    return {
        "conv1_w": u(ks[0], (C1, CIN, K, K), CIN * K * K),
        "conv1_b": u(ks[1], (C1,), CIN * K * K),
        "conv2_w": u(ks[2], (C2, C1, K, K), C1 * K * K),
        "conv2_b": u(ks[3], (C2,), C1 * K * K),
        "fc1_w": u(ks[4], (FC1, C2 * PH2 * PW2), C2 * PH2 * PW2),
        "fc1_b": u(ks[5], (FC1,), C2 * PH2 * PW2),
        "fc2_w": u(ks[6], (FC2, FC1), FC1),
        "fc2_b": u(ks[7], (FC2,), FC1),
        "fc3_w": u(ks[8], (FC3, FC2), FC2),
        "fc3_b": u(ks[9], (FC3,), FC2),
    }


if __name__ == "__main__":
    key = jax.random.PRNGKey(0)
    pkey, xkey = jax.random.split(key)
    params = init_params(pkey)
    x = jax.random.normal(xkey, (2, CIN, H0, W0), jnp.float32)   # (2, 3, 32, 32)

    prepped = prepare_params(params)                 # one-time weight prep (host/XLA)
    fwd = jax.jit(net_forward)
    out = jax.block_until_ready(fwd(prepped, x))

    assert out.shape == (2, FC3) and out.dtype == jnp.float32
    ref = reference_forward(params, x)
    assert float(jnp.max(jnp.abs(out - ref))) < 2e-2, "mismatch vs pure-JAX reference"
    print("KERNEL_OK")
</pallas_src>

<mosaic_0001>
module attributes {stable_mosaic.version = 11 : i64} {
  func.func @_lenet_kernel(%arg0: i32, %arg1: memref<1x32x96xf32, #tpu.memory_space<vmem>>, %arg2: memref<5x96x84xf32, #tpu.memory_space<vmem>>, %arg3: memref<5x96x84xf32, #tpu.memory_space<vmem>>, %arg4: memref<1x84xf32, #tpu.memory_space<vmem>>, %arg5: memref<5x84x80xf32, #tpu.memory_space<vmem>>, %arg6: memref<5x84x80xf32, #tpu.memory_space<vmem>>, %arg7: memref<1x80xf32, #tpu.memory_space<vmem>>, %arg8: memref<5x80x128xf32, #tpu.memory_space<vmem>>, %arg9: memref<1x128xf32, #tpu.memory_space<vmem>>, %arg10: memref<128x128xf32, #tpu.memory_space<vmem>>, %arg11: memref<1x128xf32, #tpu.memory_space<vmem>>, %arg12: memref<128x128xf32, #tpu.memory_space<vmem>>, %arg13: memref<1x128xf32, #tpu.memory_space<vmem>>, %arg14: memref<1x1x128xf32, #tpu.memory_space<vmem>>, %arg15: memref<28x84xf32, #tpu.memory_space<vmem>>, %arg16: memref<28x84xf32, #tpu.memory_space<vmem>>, %arg17: memref<10x80xf32, #tpu.memory_space<vmem>>, %arg18: memref<10x80xf32, #tpu.memory_space<vmem>>) attributes {dimension_semantics = [#tpu.dimension_semantics<parallel>], iteration_bounds = array<i64: 2>, scalar_prefetch = 0 : i64, scratch_operands = 4 : i64, tpu.core_type = #tpu.core_type<tc>, window_params = [{transform_indices = @transform_0, window_bounds = array<i64: 1, 32, 96>}, {pipeline_mode = #tpu.pipeline_mode<synchronous>, transform_indices = @transform_1, window_bounds = array<i64: 5, 96, 84>}, {pipeline_mode = #tpu.pipeline_mode<synchronous>, transform_indices = @transform_2, window_bounds = array<i64: 5, 96, 84>}, {pipeline_mode = #tpu.pipeline_mode<synchronous>, transform_indices = @transform_3, window_bounds = array<i64: 1, 84>}, {pipeline_mode = #tpu.pipeline_mode<synchronous>, transform_indices = @transform_4, window_bounds = array<i64: 5, 84, 80>}, {pipeline_mode = #tpu.pipeline_mode<synchronous>, transform_indices = @transform_5, window_bounds = array<i64: 5, 84, 80>}, {pipeline_mode = #tpu.pipeline_mode<synchronous>, transform_indices = @transform_6, window_bounds = array<i64: 1, 80>}, {pipeline_mode = #tpu.pipeline_mode<synchronous>, transform_indices = @transform_7, window_bounds = array<i64: 5, 80, 128>}, {pipeline_mode = #tpu.pipeline_mode<synchronous>, transform_indices = @transform_8, window_bounds = array<i64: 1, 128>}, {pipeline_mode = #tpu.pipeline_mode<synchronous>, transform_indices = @transform_9, window_bounds = array<i64: 128, 128>}, {pipeline_mode = #tpu.pipeline_mode<synchronous>, transform_indices = @transform_10, window_bounds = array<i64: 1, 128>}, {pipeline_mode = #tpu.pipeline_mode<synchronous>, transform_indices = @transform_11, window_bounds = array<i64: 128, 128>}, {pipeline_mode = #tpu.pipeline_mode<synchronous>, transform_indices = @transform_12, window_bounds = array<i64: 1, 128>}, {transform_indices = @transform_13, window_bounds = array<i64: 1, 1, 128>}]} {
    %c0 = arith.constant 0 : index
    %c0_0 = arith.constant 0 : index
    %c0_1 = arith.constant 0 : index
    %0 = vector.load %arg1[%c0, %c0_0, %c0_1] : memref<1x32x96xf32, #tpu.memory_space<vmem>>, vector<1x32x96xf32>
    %1 = vector.shape_cast %0 : vector<1x32x96xf32> to vector<32x96xf32>
    %cst = arith.constant 0.000000e+00 : f32
    %2 = vector.broadcast %cst : f32 to vector<28x84xf32>
    %cst_2 = arith.constant 0.000000e+00 : f32
    %3 = vector.broadcast %cst_2 : f32 to vector<28x84xf32>
    %4 = vector.extract_strided_slice %1 {offsets = [0, 0], sizes = [28, 96], strides = [1, 1]} : vector<32x96xf32> to vector<28x96xf32>
    %c0_3 = arith.constant 0 : index
    %c0_4 = arith.constant 0 : index
    %c0_5 = arith.constant 0 : index
    %5 = vector.load %arg2[%c0_3, %c0_4, %c0_5] : memref<5x96x84xf32, #tpu.memory_space<vmem>>, vector<1x96x84xf32>
    %6 = vector.shape_cast %5 : vector<1x96x84xf32> to vector<96x84xf32>
    %cst_6 = arith.constant dense<0.000000e+00> : vector<28x84xf32>
    %7 = tpu.matmul %4, %6, %cst_6 {dimension_numbers = #tpu.dot_dimension_numbers<[1], [0], [0], [1], [0, 0, 1, 1], [], []>} : vector<28x96xf32>, vector<96x84xf32>, vector<28x84xf32> -> vector<28x84xf32>
    %8 = arith.addf %2, %7 : vector<28x84xf32>
    %c0_7 = arith.constant 0 : index
    %c0_8 = arith.constant 0 : index
    %c0_9 = arith.constant 0 : index
    %9 = vector.load %arg3[%c0_7, %c0_8, %c0_9] : memref<5x96x84xf32, #tpu.memory_space<vmem>>, vector<1x96x84xf32>
    %10 = vector.shape_cast %9 : vector<1x96x84xf32> to vector<96x84xf32>
    %cst_10 = arith.constant dense<0.000000e+00> : vector<28x84xf32>
    %11 = tpu.matmul %4, %10, %cst_10 {dimension_numbers = #tpu.dot_dimension_numbers<[1], [0], [0], [1], [0, 0, 1, 1], [], []>} : vector<28x96xf32>, vector<96x84xf32>, vector<28x84xf32> -> vector<28x84xf32>
    %12 = arith.addf %3, %11 : vector<28x84xf32>
    %13 = vector.extract_strided_slice %1 {offsets = [1, 0], sizes = [28, 96], strides = [1, 1]} : vector<32x96xf32> to vector<28x96xf32>
    %c1 = arith.constant 1 : index
    %c0_11 = arith.constant 0 : index
    %c0_12 = arith.constant 0 : index
    %14 = vector.load %arg2[%c1, %c0_11, %c0_12] : memref<5x96x84xf32, #tpu.memory_space<vmem>>, vector<1x96x84xf32>
    %15 = vector.shape_cast %14 : vector<1x96x84xf32> to vector<96x84xf32>
    %cst_13 = arith.constant dense<0.000000e+00> : vector<28x84xf32>
    %16 = tpu.matmul %13, %15, %cst_13 {dimension_numbers = #tpu.dot_dimension_numbers<[1], [0], [0], [1], [0, 0, 1, 1], [], []>} : vector<28x96xf32>, vector<96x84xf32>, vector<28x84xf32> -> vector<28x84xf32>
    %17 = arith.addf %8, %16 : vector<28x84xf32>
    %c1_14 = arith.constant 1 : index
    %c0_15 = arith.constant 0 : index
    %c0_16 = arith.constant 0 : index
    %18 = vector.load %arg3[%c1_14, %c0_15, %c0_16] : memref<5x96x84xf32, #tpu.memory_space<vmem>>, vector<1x96x84xf32>
    %19 = vector.shape_cast %18 : vector<1x96x84xf32> to vector<96x84xf32>
    %cst_17 = arith.constant dense<0.000000e+00> : vector<28x84xf32>
    %20 = tpu.matmul %13, %19, %cst_17 {dimension_numbers = #tpu.dot_dimension_numbers<[1], [0], [0], [1], [0, 0, 1, 1], [], []>} : vector<28x96xf32>, vector<96x84xf32>, vector<28x84xf32> -> vector<28x84xf32>
    %21 = arith.addf %12, %20 : vector<28x84xf32>
    %22 = vector.extract_strided_slice %1 {offsets = [2, 0], sizes = [28, 96], strides = [1, 1]} : vector<32x96xf32> to vector<28x96xf32>
    %c2 = arith.constant 2 : index
    %c0_18 = arith.constant 0 : index
    %c0_19 = arith.constant 0 : index
    %23 = vector.load %arg2[%c2, %c0_18, %c0_19] : memref<5x96x84xf32, #tpu.memory_space<vmem>>, vector<1x96x84xf32>
    %24 = vector.shape_cast %23 : vector<1x96x84xf32> to vector<96x84xf32>
    %cst_20 = arith.constant dense<0.000000e+00> : vector<28x84xf32>
    %25 = tpu.matmul %22, %24, %cst_20 {dimension_numbers = #tpu.dot_dimension_numbers<[1], [0], [0], [1], [0, 0, 1, 1], [], []>} : vector<28x96xf32>, vector<96x84xf32>, vector<28x84xf32> -> vector<28x84xf32>
    %26 = arith.addf %17, %25 : vector<28x84xf32>
    %c2_21 = arith.constant 2 : index
    %c0_22 = arith.constant 0 : index
    %c0_23 = arith.constant 0 : index
    %27 = vector.load %arg3[%c2_21, %c0_22, %c0_23] : memref<5x96x84xf32, #tpu.memory_space<vmem>>, vector<1x96x84xf32>
    %28 = vector.shape_cast %27 : vector<1x96x84xf32> to vector<96x84xf32>
    %cst_24 = arith.constant dense<0.000000e+00> : vector<28x84xf32>
    %29 = tpu.matmul %22, %28, %cst_24 {dimension_numbers = #tpu.dot_dimension_numbers<[1], [0], [0], [1], [0, 0, 1, 1], [], []>} : vector<28x96xf32>, vector<96x84xf32>, vector<28x84xf32> -> vector<28x84xf32>
    %30 = arith.addf %21, %29 : vector<28x84xf32>
    %31 = vector.extract_strided_slice %1 {offsets = [3, 0], sizes = [28, 96], strides = [1, 1]} : vector<32x96xf32> to vector<28x96xf32>
    %c3 = arith.constant 3 : index
    %c0_25 = arith.constant 0 : index
    %c0_26 = arith.constant 0 : index
    %32 = vector.load %arg2[%c3, %c0_25, %c0_26] : memref<5x96x84xf32, #tpu.memory_space<vmem>>, vector<1x96x84xf32>
    %33 = vector.shape_cast %32 : vector<1x96x84xf32> to vector<96x84xf32>
    %cst_27 = arith.constant dense<0.000000e+00> : vector<28x84xf32>
    %34 = tpu.matmul %31, %33, %cst_27 {dimension_numbers = #tpu.dot_dimension_numbers<[1], [0], [0], [1], [0, 0, 1, 1], [], []>} : vector<28x96xf32>, vector<96x84xf32>, vector<28x84xf32> -> vector<28x84xf32>
    %35 = arith.addf %26, %34 : vector<28x84xf32>
    %c3_28 = arith.constant 3 : index
    %c0_29 = arith.constant 0 : index
    %c0_30 = arith.constant 0 : index
    %36 = vector.load %arg3[%c3_28, %c0_29, %c0_30] : memref<5x96x84xf32, #tpu.memory_space<vmem>>, vector<1x96x84xf32>
    %37 = vector.shape_cast %36 : vector<1x96x84xf32> to vector<96x84xf32>
    %cst_31 = arith.constant dense<0.000000e+00> : vector<28x84xf32>
    %38 = tpu.matmul %31, %37, %cst_31 {dimension_numbers = #tpu.dot_dimension_numbers<[1], [0], [0], [1], [0, 0, 1, 1], [], []>} : vector<28x96xf32>, vector<96x84xf32>, vector<28x84xf32> -> vector<28x84xf32>
    %39 = arith.addf %30, %38 : vector<28x84xf32>
    %40 = vector.extract_strided_slice %1 {offsets = [4, 0], sizes = [28, 96], strides = [1, 1]} : vector<32x96xf32> to vector<28x96xf32>
    %c4 = arith.constant 4 : index
    %c0_32 = arith.constant 0 : index
    %c0_33 = arith.constant 0 : index
    %41 = vector.load %arg2[%c4, %c0_32, %c0_33] : memref<5x96x84xf32, #tpu.memory_space<vmem>>, vector<1x96x84xf32>
    %42 = vector.shape_cast %41 : vector<1x96x84xf32> to vector<96x84xf32>
    %cst_34 = arith.constant dense<0.000000e+00> : vector<28x84xf32>
    %43 = tpu.matmul %40, %42, %cst_34 {dimension_numbers = #tpu.dot_dimension_numbers<[1], [0], [0], [1], [0, 0, 1, 1], [], []>} : vector<28x96xf32>, vector<96x84xf32>, vector<28x84xf32> -> vector<28x84xf32>
    %44 = arith.addf %35, %43 : vector<28x84xf32>
    %c4_35 = arith.constant 4 : index
    %c0_36 = arith.constant 0 : index
    %c0_37 = arith.constant 0 : index
    %45 = vector.load %arg3[%c4_35, %c0_36, %c0_37] : memref<5x96x84xf32, #tpu.memory_space<vmem>>, vector<1x96x84xf32>
    %46 = vector.shape_cast %45 : vector<1x96x84xf32> to vector<96x84xf32>
    %cst_38 = arith.constant dense<0.000000e+00> : vector<28x84xf32>
    %47 = tpu.matmul %40, %46, %cst_38 {dimension_numbers = #tpu.dot_dimension_numbers<[1], [0], [0], [1], [0, 0, 1, 1], [], []>} : vector<28x96xf32>, vector<96x84xf32>, vector<28x84xf32> -> vector<28x84xf32>
    %48 = arith.addf %39, %47 : vector<28x84xf32>
    %c0_39 = arith.constant 0 : index
    %c0_40 = arith.constant 0 : index
    %49 = vector.load %arg4[%c0_39, %c0_40] : memref<1x84xf32, #tpu.memory_space<vmem>>, vector<1x84xf32>
    %50 = vector.broadcast %49 : vector<1x84xf32> to vector<28x84xf32>
    %51 = arith.addf %44, %50 : vector<28x84xf32>
    %cst_41 = arith.constant 0.000000e+00 : f32
    %52 = vector.broadcast %cst_41 : f32 to vector<28x84xf32>
    %53 = arith.maximumf %51, %52 : vector<28x84xf32>
    %c0_42 = arith.constant 0 : index
    %c0_43 = arith.constant 0 : index
    %54 = vector.load %arg15[%c0_42, %c0_43] : memref<28x84xf32, #tpu.memory_space<vmem>>, vector<28x84xf32>
    tpu.vector_store %arg15[%c0_42, %c0_43], %53 {strides = array<i32>} : memref<28x84xf32, #tpu.memory_space<vmem>>, vector<28x84xf32>,
    %c0_44 = arith.constant 0 : index
    %c0_45 = arith.constant 0 : index
    %55 = vector.load %arg4[%c0_44, %c0_45] : memref<1x84xf32, #tpu.memory_space<vmem>>, vector<1x84xf32>
    %56 = vector.broadcast %55 : vector<1x84xf32> to vector<28x84xf32>
    %57 = arith.addf %48, %56 : vector<28x84xf32>
    %cst_46 = arith.constant 0.000000e+00 : f32
    %58 = vector.broadcast %cst_46 : f32 to vector<28x84xf32>
    %59 = arith.maximumf %57, %58 : vector<28x84xf32>
    %c0_47 = arith.constant 0 : index
    %c0_48 = arith.constant 0 : index
    %60 = vector.load %arg16[%c0_47, %c0_48] : memref<28x84xf32, #tpu.memory_space<vmem>>, vector<28x84xf32>
    tpu.vector_store %arg16[%c0_47, %c0_48], %59 {strides = array<i32>} : memref<28x84xf32, #tpu.memory_space<vmem>>, vector<28x84xf32>,
    %c0_49 = arith.constant 0 : index
    %c0_50 = arith.constant 0 : index
    %61 = tpu.strided_load %arg15[%c0_49, %c0_50] {strides = array<i32: 2, 1>} : memref<28x84xf32, #tpu.memory_space<vmem>>, vector<14x84xf32>
    %c1_51 = arith.constant 1 : index
    %c0_52 = arith.constant 0 : index
    %62 = tpu.strided_load %arg15[%c1_51, %c0_52] {strides = array<i32: 2, 1>} : memref<28x84xf32, #tpu.memory_space<vmem>>, vector<14x84xf32>
    %63 = arith.maximumf %61, %62 : vector<14x84xf32>
    %c0_53 = arith.constant 0 : index
    %c0_54 = arith.constant 0 : index
    %64 = tpu.strided_load %arg16[%c0_53, %c0_54] {strides = array<i32: 2, 1>} : memref<28x84xf32, #tpu.memory_space<vmem>>, vector<14x84xf32>
    %c1_55 = arith.constant 1 : index
    %c0_56 = arith.constant 0 : index
    %65 = tpu.strided_load %arg16[%c1_55, %c0_56] {strides = array<i32: 2, 1>} : memref<28x84xf32, #tpu.memory_space<vmem>>, vector<14x84xf32>
    %66 = arith.maximumf %64, %65 : vector<14x84xf32>
    %67 = arith.maximumf %63, %66 : vector<14x84xf32>
    %cst_57 = arith.constant 0.000000e+00 : f32
    %68 = vector.broadcast %cst_57 : f32 to vector<10x80xf32>
    %cst_58 = arith.constant 0.000000e+00 : f32
    %69 = vector.broadcast %cst_58 : f32 to vector<10x80xf32>
    %70 = vector.extract_strided_slice %67 {offsets = [0, 0], sizes = [10, 84], strides = [1, 1]} : vector<14x84xf32> to vector<10x84xf32>
    %c0_59 = arith.constant 0 : index
    %c0_60 = arith.constant 0 : index
    %c0_61 = arith.constant 0 : index
    %71 = vector.load %arg5[%c0_59, %c0_60, %c0_61] : memref<5x84x80xf32, #tpu.memory_space<vmem>>, vector<1x84x80xf32>
    %72 = vector.shape_cast %71 : vector<1x84x80xf32> to vector<84x80xf32>
    %cst_62 = arith.constant dense<0.000000e+00> : vector<10x80xf32>
    %73 = tpu.matmul %70, %72, %cst_62 {dimension_numbers = #tpu.dot_dimension_numbers<[1], [0], [0], [1], [0, 0, 1, 1], [], []>} : vector<10x84xf32>, vector<84x80xf32>, vector<10x80xf32> -> vector<10x80xf32>
    %74 = arith.addf %68, %73 : vector<10x80xf32>
    %c0_63 = arith.constant 0 : index
    %c0_64 = arith.constant 0 : index
    %c0_65 = arith.constant 0 : index
    %75 = vector.load %arg6[%c0_63, %c0_64, %c0_65] : memref<5x84x80xf32, #tpu.memory_space<vmem>>, vector<1x84x80xf32>
    %76 = vector.shape_cast %75 : vector<1x84x80xf32> to vector<84x80xf32>
    %cst_66 = arith.constant dense<0.000000e+00> : vector<10x80xf32>
    %77 = tpu.matmul %70, %76, %cst_66 {dimension_numbers = #tpu.dot_dimension_numbers<[1], [0], [0], [1], [0, 0, 1, 1], [], []>} : vector<10x84xf32>, vector<84x80xf32>, vector<10x80xf32> -> vector<10x80xf32>
    %78 = arith.addf %69, %77 : vector<10x80xf32>
    %79 = vector.extract_strided_slice %67 {offsets = [1, 0], sizes = [10, 84], strides = [1, 1]} : vector<14x84xf32> to vector<10x84xf32>
    %c1_67 = arith.constant 1 : index
    %c0_68 = arith.constant 0 : index
    %c0_69 = arith.constant 0 : index
    %80 = vector.load %arg5[%c1_67, %c0_68, %c0_69] : memref<5x84x80xf32, #tpu.memory_space<vmem>>, vector<1x84x80xf32>
    %81 = vector.shape_cast %80 : vector<1x84x80xf32> to vector<84x80xf32>
    %cst_70 = arith.constant dense<0.000000e+00> : vector<10x80xf32>
    %82 = tpu.matmul %79, %81, %cst_70 {dimension_numbers = #tpu.dot_dimension_numbers<[1], [0], [0], [1], [0, 0, 1, 1], [], []>} : vector<10x84xf32>, vector<84x80xf32>, vector<10x80xf32> -> vector<10x80xf32>
    %83 = arith.addf %74, %82 : vector<10x80xf32>
    %c1_71 = arith.constant 1 : index
    %c0_72 = arith.constant 0 : index
    %c0_73 = arith.constant 0 : index
    %84 = vector.load %arg6[%c1_71, %c0_72, %c0_73] : memref<5x84x80xf32, #tpu.memory_space<vmem>>, vector<1x84x80xf32>
    %85 = vector.shape_cast %84 : vector<1x84x80xf32> to vector<84x80xf32>
    %cst_74 = arith.constant dense<0.000000e+00> : vector<10x80xf32>
    %86 = tpu.matmul %79, %85, %cst_74 {dimension_numbers = #tpu.dot_dimension_numbers<[1], [0], [0], [1], [0, 0, 1, 1], [], []>} : vector<10x84xf32>, vector<84x80xf32>, vector<10x80xf32> -> vector<10x80xf32>
    %87 = arith.addf %78, %86 : vector<10x80xf32>
    %88 = vector.extract_strided_slice %67 {offsets = [2, 0], sizes = [10, 84], strides = [1, 1]} : vector<14x84xf32> to vector<10x84xf32>
    %c2_75 = arith.constant 2 : index
    %c0_76 = arith.constant 0 : index
    %c0_77 = arith.constant 0 : index
    %89 = vector.load %arg5[%c2_75, %c0_76, %c0_77] : memref<5x84x80xf32, #tpu.memory_space<vmem>>, vector<1x84x80xf32>
    %90 = vector.shape_cast %89 : vector<1x84x80xf32> to vector<84x80xf32>
    %cst_78 = arith.constant dense<0.000000e+00> : vector<10x80xf32>
    %91 = tpu.matmul %88, %90, %cst_78 {dimension_numbers = #tpu.dot_dimension_numbers<[1], [0], [0], [1], [0, 0, 1, 1], [], []>} : vector<10x84xf32>, vector<84x80xf32>, vector<10x80xf32> -> vector<10x80xf32>
    %92 = arith.addf %83, %91 : vector<10x80xf32>
    %c2_79 = arith.constant 2 : index
    %c0_80 = arith.constant 0 : index
    %c0_81 = arith.constant 0 : index
    %93 = vector.load %arg6[%c2_79, %c0_80, %c0_81] : memref<5x84x80xf32, #tpu.memory_space<vmem>>, vector<1x84x80xf32>
    %94 = vector.shape_cast %93 : vector<1x84x80xf32> to vector<84x80xf32>
    %cst_82 = arith.constant dense<0.000000e+00> : vector<10x80xf32>
    %95 = tpu.matmul %88, %94, %cst_82 {dimension_numbers = #tpu.dot_dimension_numbers<[1], [0], [0], [1], [0, 0, 1, 1], [], []>} : vector<10x84xf32>, vector<84x80xf32>, vector<10x80xf32> -> vector<10x80xf32>
    %96 = arith.addf %87, %95 : vector<10x80xf32>
    %97 = vector.extract_strided_slice %67 {offsets = [3, 0], sizes = [10, 84], strides = [1, 1]} : vector<14x84xf32> to vector<10x84xf32>
    %c3_83 = arith.constant 3 : index
    %c0_84 = arith.constant 0 : index
    %c0_85 = arith.constant 0 : index
    %98 = vector.load %arg5[%c3_83, %c0_84, %c0_85] : memref<5x84x80xf32, #tpu.memory_space<vmem>>, vector<1x84x80xf32>
    %99 = vector.shape_cast %98 : vector<1x84x80xf32> to vector<84x80xf32>
    %cst_86 = arith.constant dense<0.000000e+00> : vector<10x80xf32>
    %100 = tpu.matmul %97, %99, %cst_86 {dimension_numbers = #tpu.dot_dimension_numbers<[1], [0], [0], [1], [0, 0, 1, 1], [], []>} : vector<10x84xf32>, vector<84x80xf32>, vector<10x80xf32> -> vector<10x80xf32>
    %101 = arith.addf %92, %100 : vector<10x80xf32>
    %c3_87 = arith.constant 3 : index
    %c0_88 = arith.constant 0 : index
    %c0_89 = arith.constant 0 : index
    %102 = vector.load %arg6[%c3_87, %c0_88, %c0_89] : memref<5x84x80xf32, #tpu.memory_space<vmem>>, vector<1x84x80xf32>
    %103 = vector.shape_cast %102 : vector<1x84x80xf32> to vector<84x80xf32>
    %cst_90 = arith.constant dense<0.000000e+00> : vector<10x80xf32>
    %104 = tpu.matmul %97, %103, %cst_90 {dimension_numbers = #tpu.dot_dimension_numbers<[1], [0], [0], [1], [0, 0, 1, 1], [], []>} : vector<10x84xf32>, vector<84x80xf32>, vector<10x80xf32> -> vector<10x80xf32>
    %105 = arith.addf %96, %104 : vector<10x80xf32>
    %106 = vector.extract_strided_slice %67 {offsets = [4, 0], sizes = [10, 84], strides = [1, 1]} : vector<14x84xf32> to vector<10x84xf32>
    %c4_91 = arith.constant 4 : index
    %c0_92 = arith.constant 0 : index
    %c0_93 = arith.constant 0 : index
    %107 = vector.load %arg5[%c4_91, %c0_92, %c0_93] : memref<5x84x80xf32, #tpu.memory_space<vmem>>, vector<1x84x80xf32>
    %108 = vector.shape_cast %107 : vector<1x84x80xf32> to vector<84x80xf32>
    %cst_94 = arith.constant dense<0.000000e+00> : vector<10x80xf32>
    %109 = tpu.matmul %106, %108, %cst_94 {dimension_numbers = #tpu.dot_dimension_numbers<[1], [0], [0], [1], [0, 0, 1, 1], [], []>} : vector<10x84xf32>, vector<84x80xf32>, vector<10x80xf32> -> vector<10x80xf32>
    %110 = arith.addf %101, %109 : vector<10x80xf32>
    %c4_95 = arith.constant 4 : index
    %c0_96 = arith.constant 0 : index
    %c0_97 = arith.constant 0 : index
    %111 = vector.load %arg6[%c4_95, %c0_96, %c0_97] : memref<5x84x80xf32, #tpu.memory_space<vmem>>, vector<1x84x80xf32>
    %112 = vector.shape_cast %111 : vector<1x84x80xf32> to vector<84x80xf32>
    %cst_98 = arith.constant dense<0.000000e+00> : vector<10x80xf32>
    %113 = tpu.matmul %106, %112, %cst_98 {dimension_numbers = #tpu.dot_dimension_numbers<[1], [0], [0], [1], [0, 0, 1, 1], [], []>} : vector<10x84xf32>, vector<84x80xf32>, vector<10x80xf32> -> vector<10x80xf32>
    %114 = arith.addf %105, %113 : vector<10x80xf32>
    %c0_99 = arith.constant 0 : index
    %c0_100 = arith.constant 0 : index
    %115 = vector.load %arg7[%c0_99, %c0_100] : memref<1x80xf32, #tpu.memory_space<vmem>>, vector<1x80xf32>
    %116 = vector.broadcast %115 : vector<1x80xf32> to vector<10x80xf32>
    %117 = arith.addf %110, %116 : vector<10x80xf32>
    %cst_101 = arith.constant 0.000000e+00 : f32
    %118 = vector.broadcast %cst_101 : f32 to vector<10x80xf32>
    %119 = arith.maximumf %117, %118 : vector<10x80xf32>
    %c0_102 = arith.constant 0 : index
    %c0_103 = arith.constant 0 : index
    %120 = vector.load %arg17[%c0_102, %c0_103] : memref<10x80xf32, #tpu.memory_space<vmem>>, vector<10x80xf32>
    tpu.vector_store %arg17[%c0_102, %c0_103], %119 {strides = array<i32>} : memref<10x80xf32, #tpu.memory_space<vmem>>, vector<10x80xf32>,
    %c0_104 = arith.constant 0 : index
    %c0_105 = arith.constant 0 : index
    %121 = vector.load %arg7[%c0_104, %c0_105] : memref<1x80xf32, #tpu.memory_space<vmem>>, vector<1x80xf32>
    %122 = vector.broadcast %121 : vector<1x80xf32> to vector<10x80xf32>
    %123 = arith.addf %114, %122 : vector<10x80xf32>
    %cst_106 = arith.constant 0.000000e+00 : f32
    %124 = vector.broadcast %cst_106 : f32 to vector<10x80xf32>
    %125 = arith.maximumf %123, %124 : vector<10x80xf32>
    %c0_107 = arith.constant 0 : index
    %c0_108 = arith.constant 0 : index
    %126 = vector.load %arg18[%c0_107, %c0_108] : memref<10x80xf32, #tpu.memory_space<vmem>>, vector<10x80xf32>
    tpu.vector_store %arg18[%c0_107, %c0_108], %125 {strides = array<i32>} : memref<10x80xf32, #tpu.memory_space<vmem>>, vector<10x80xf32>,
    %c0_109 = arith.constant 0 : index
    %c0_110 = arith.constant 0 : index
    %127 = tpu.strided_load %arg17[%c0_109, %c0_110] {strides = array<i32: 2, 1>} : memref<10x80xf32, #tpu.memory_space<vmem>>, vector<5x80xf32>
    %c1_111 = arith.constant 1 : index
    %c0_112 = arith.constant 0 : index
    %128 = tpu.strided_load %arg17[%c1_111, %c0_112] {strides = array<i32: 2, 1>} : memref<10x80xf32, #tpu.memory_space<vmem>>, vector<5x80xf32>
    %129 = arith.maximumf %127, %128 : vector<5x80xf32>
    %c0_113 = arith.constant 0 : index
    %c0_114 = arith.constant 0 : index
    %130 = tpu.strided_load %arg18[%c0_113, %c0_114] {strides = array<i32: 2, 1>} : memref<10x80xf32, #tpu.memory_space<vmem>>, vector<5x80xf32>
    %c1_115 = arith.constant 1 : index
    %c0_116 = arith.constant 0 : index
    %131 = tpu.strided_load %arg18[%c1_115, %c0_116] {strides = array<i32: 2, 1>} : memref<10x80xf32, #tpu.memory_space<vmem>>, vector<5x80xf32>
    %132 = arith.maximumf %130, %131 : vector<5x80xf32>
    %133 = arith.maximumf %129, %132 : vector<5x80xf32>
    %c0_117 = arith.constant 0 : index
    %c0_118 = arith.constant 0 : index
    %134 = vector.load %arg9[%c0_117, %c0_118] : memref<1x128xf32, #tpu.memory_space<vmem>>, vector<1x128xf32>
    %135 = vector.extract_strided_slice %133 {offsets = [0, 0], sizes = [1, 80], strides = [1, 1]} : vector<5x80xf32> to vector<1x80xf32>
    %c0_119 = arith.constant 0 : index
    %c0_120 = arith.constant 0 : index
    %c0_121 = arith.constant 0 : index
    %136 = vector.load %arg8[%c0_119, %c0_120, %c0_121] : memref<5x80x128xf32, #tpu.memory_space<vmem>>, vector<1x80x128xf32>
    %137 = vector.shape_cast %136 : vector<1x80x128xf32> to vector<80x128xf32>
    %cst_122 = arith.constant dense<0.000000e+00> : vector<1x128xf32>
    %138 = tpu.matmul %135, %137, %cst_122 {dimension_numbers = #tpu.dot_dimension_numbers<[1], [0], [0], [1], [0, 0, 1, 1], [], []>} : vector<1x80xf32>, vector<80x128xf32>, vector<1x128xf32> -> vector<1x128xf32>
    %139 = arith.addf %134, %138 : vector<1x128xf32>
    %140 = vector.extract_strided_slice %133 {offsets = [1, 0], sizes = [1, 80], strides = [1, 1]} : vector<5x80xf32> to vector<1x80xf32>
    %c1_123 = arith.constant 1 : index
    %c0_124 = arith.constant 0 : index
    %c0_125 = arith.constant 0 : index
    %141 = vector.load %arg8[%c1_123, %c0_124, %c0_125] : memref<5x80x128xf32, #tpu.memory_space<vmem>>, vector<1x80x128xf32>
    %142 = vector.shape_cast %141 : vector<1x80x128xf32> to vector<80x128xf32>
    %cst_126 = arith.constant dense<0.000000e+00> : vector<1x128xf32>
    %143 = tpu.matmul %140, %142, %cst_126 {dimension_numbers = #tpu.dot_dimension_numbers<[1], [0], [0], [1], [0, 0, 1, 1], [], []>} : vector<1x80xf32>, vector<80x128xf32>, vector<1x128xf32> -> vector<1x128xf32>
    %144 = arith.addf %139, %143 : vector<1x128xf32>
    %145 = vector.extract_strided_slice %133 {offsets = [2, 0], sizes = [1, 80], strides = [1, 1]} : vector<5x80xf32> to vector<1x80xf32>
    %c2_127 = arith.constant 2 : index
    %c0_128 = arith.constant 0 : index
    %c0_129 = arith.constant 0 : index
    %146 = vector.load %arg8[%c2_127, %c0_128, %c0_129] : memref<5x80x128xf32, #tpu.memory_space<vmem>>, vector<1x80x128xf32>
    %147 = vector.shape_cast %146 : vector<1x80x128xf32> to vector<80x128xf32>
    %cst_130 = arith.constant dense<0.000000e+00> : vector<1x128xf32>
    %148 = tpu.matmul %145, %147, %cst_130 {dimension_numbers = #tpu.dot_dimension_numbers<[1], [0], [0], [1], [0, 0, 1, 1], [], []>} : vector<1x80xf32>, vector<80x128xf32>, vector<1x128xf32> -> vector<1x128xf32>
    %149 = arith.addf %144, %148 : vector<1x128xf32>
    %150 = vector.extract_strided_slice %133 {offsets = [3, 0], sizes = [1, 80], strides = [1, 1]} : vector<5x80xf32> to vector<1x80xf32>
    %c3_131 = arith.constant 3 : index
    %c0_132 = arith.constant 0 : index
    %c0_133 = arith.constant 0 : index
    %151 = vector.load %arg8[%c3_131, %c0_132, %c0_133] : memref<5x80x128xf32, #tpu.memory_space<vmem>>, vector<1x80x128xf32>
    %152 = vector.shape_cast %151 : vector<1x80x128xf32> to vector<80x128xf32>
    %cst_134 = arith.constant dense<0.000000e+00> : vector<1x128xf32>
    %153 = tpu.matmul %150, %152, %cst_134 {dimension_numbers = #tpu.dot_dimension_numbers<[1], [0], [0], [1], [0, 0, 1, 1], [], []>} : vector<1x80xf32>, vector<80x128xf32>, vector<1x128xf32> -> vector<1x128xf32>
    %154 = arith.addf %149, %153 : vector<1x128xf32>
    %155 = vector.extract_strided_slice %133 {offsets = [4, 0], sizes = [1, 80], strides = [1, 1]} : vector<5x80xf32> to vector<1x80xf32>
    %c4_135 = arith.constant 4 : index
    %c0_136 = arith.constant 0 : index
    %c0_137 = arith.constant 0 : index
    %156 = vector.load %arg8[%c4_135, %c0_136, %c0_137] : memref<5x80x128xf32, #tpu.memory_space<vmem>>, vector<1x80x128xf32>
    %157 = vector.shape_cast %156 : vector<1x80x128xf32> to vector<80x128xf32>
    %cst_138 = arith.constant dense<0.000000e+00> : vector<1x128xf32>
    %158 = tpu.matmul %155, %157, %cst_138 {dimension_numbers = #tpu.dot_dimension_numbers<[1], [0], [0], [1], [0, 0, 1, 1], [], []>} : vector<1x80xf32>, vector<80x128xf32>, vector<1x128xf32> -> vector<1x128xf32>
    %159 = arith.addf %154, %158 : vector<1x128xf32>
    %cst_139 = arith.constant 0.000000e+00 : f32
    %160 = vector.broadcast %cst_139 : f32 to vector<1x128xf32>
    %161 = arith.maximumf %159, %160 : vector<1x128xf32>
    %c0_140 = arith.constant 0 : index
    %c0_141 = arith.constant 0 : index
    %162 = vector.load %arg10[%c0_140, %c0_141] : memref<128x128xf32, #tpu.memory_space<vmem>>, vector<128x128xf32>
    %cst_142 = arith.constant dense<0.000000e+00> : vector<1x128xf32>
    %163 = tpu.matmul %161, %162, %cst_142 {dimension_numbers = #tpu.dot_dimension_numbers<[1], [0], [0], [1], [0, 0, 1, 1], [], []>} : vector<1x128xf32>, vector<128x128xf32>, vector<1x128xf32> -> vector<1x128xf32>
    %c0_143 = arith.constant 0 : index
    %c0_144 = arith.constant 0 : index
    %164 = vector.load %arg11[%c0_143, %c0_144] : memref<1x128xf32, #tpu.memory_space<vmem>>, vector<1x128xf32>
    %165 = arith.addf %163, %164 : vector<1x128xf32>
    %cst_145 = arith.constant 0.000000e+00 : f32
    %166 = vector.broadcast %cst_145 : f32 to vector<1x128xf32>
    %167 = arith.maximumf %165, %166 : vector<1x128xf32>
    %c0_146 = arith.constant 0 : index
    %c0_147 = arith.constant 0 : index
    %168 = vector.load %arg12[%c0_146, %c0_147] : memref<128x128xf32, #tpu.memory_space<vmem>>, vector<128x128xf32>
    %cst_148 = arith.constant dense<0.000000e+00> : vector<1x128xf32>
    %169 = tpu.matmul %167, %168, %cst_148 {dimension_numbers = #tpu.dot_dimension_numbers<[1], [0], [0], [1], [0, 0, 1, 1], [], []>} : vector<1x128xf32>, vector<128x128xf32>, vector<1x128xf32> -> vector<1x128xf32>
    %c0_149 = arith.constant 0 : index
    %c0_150 = arith.constant 0 : index
    %170 = vector.load %arg13[%c0_149, %c0_150] : memref<1x128xf32, #tpu.memory_space<vmem>>, vector<1x128xf32>
    %171 = arith.addf %169, %170 : vector<1x128xf32>
    %172 = vector.shape_cast %171 : vector<1x128xf32> to vector<1x1x128xf32>
    %c0_151 = arith.constant 0 : index
    %c0_152 = arith.constant 0 : index
    %c0_153 = arith.constant 0 : index
    %173 = vector.load %arg14[%c0_151, %c0_152, %c0_153] : memref<1x1x128xf32, #tpu.memory_space<vmem>>, vector<1x1x128xf32>
    tpu.vector_store %arg14[%c0_151, %c0_152, %c0_153], %172 {strides = array<i32>} : memref<1x1x128xf32, #tpu.memory_space<vmem>>, vector<1x1x128xf32>,
    return
  }
  func.func @transform_0(%arg0: i32) -> (i32, i32, i32) {
    %c0_i32 = arith.constant 0 : i32
    %c0_i32_0 = arith.constant 0 : i32
    %c0_i32_1 = arith.constant 0 : i32
    return %arg0, %c0_i32, %c0_i32_0 : i32, i32, i32
  }
  func.func @transform_1(%arg0: i32) -> (i32, i32, i32) {
    %c0_i32 = arith.constant 0 : i32
    %c0_i32_0 = arith.constant 0 : i32
    %c0_i32_1 = arith.constant 0 : i32
    %c0_i32_2 = arith.constant 0 : i32
    return %c0_i32, %c0_i32_0, %c0_i32_1 : i32, i32, i32
  }
  func.func @transform_2(%arg0: i32) -> (i32, i32, i32) {
    %c0_i32 = arith.constant 0 : i32
    %c0_i32_0 = arith.constant 0 : i32
    %c0_i32_1 = arith.constant 0 : i32
    %c0_i32_2 = arith.constant 0 : i32
    return %c0_i32, %c0_i32_0, %c0_i32_1 : i32, i32, i32
  }
  func.func @transform_3(%arg0: i32) -> (i32, i32) {
    %c0_i32 = arith.constant 0 : i32
    %c0_i32_0 = arith.constant 0 : i32
    %c0_i32_1 = arith.constant 0 : i32
    return %c0_i32, %c0_i32_0 : i32, i32
  }
  func.func @transform_4(%arg0: i32) -> (i32, i32, i32) {
    %c0_i32 = arith.constant 0 : i32
    %c0_i32_0 = arith.constant 0 : i32
    %c0_i32_1 = arith.constant 0 : i32
    %c0_i32_2 = arith.constant 0 : i32
    return %c0_i32, %c0_i32_0, %c0_i32_1 : i32, i32, i32
  }
  func.func @transform_5(%arg0: i32) -> (i32, i32, i32) {
    %c0_i32 = arith.constant 0 : i32
    %c0_i32_0 = arith.constant 0 : i32
    %c0_i32_1 = arith.constant 0 : i32
    %c0_i32_2 = arith.constant 0 : i32
    return %c0_i32, %c0_i32_0, %c0_i32_1 : i32, i32, i32
  }
  func.func @transform_6(%arg0: i32) -> (i32, i32) {
    %c0_i32 = arith.constant 0 : i32
    %c0_i32_0 = arith.constant 0 : i32
    %c0_i32_1 = arith.constant 0 : i32
    return %c0_i32, %c0_i32_0 : i32, i32
  }
  func.func @transform_7(%arg0: i32) -> (i32, i32, i32) {
    %c0_i32 = arith.constant 0 : i32
    %c0_i32_0 = arith.constant 0 : i32
    %c0_i32_1 = arith.constant 0 : i32
    %c0_i32_2 = arith.constant 0 : i32
    return %c0_i32, %c0_i32_0, %c0_i32_1 : i32, i32, i32
  }
  func.func @transform_8(%arg0: i32) -> (i32, i32) {
    %c0_i32 = arith.constant 0 : i32
    %c0_i32_0 = arith.constant 0 : i32
    %c0_i32_1 = arith.constant 0 : i32
    return %c0_i32, %c0_i32_0 : i32, i32
  }
  func.func @transform_9(%arg0: i32) -> (i32, i32) {
    %c0_i32 = arith.constant 0 : i32
    %c0_i32_0 = arith.constant 0 : i32
    %c0_i32_1 = arith.constant 0 : i32
    return %c0_i32, %c0_i32_0 : i32, i32
  }
  func.func @transform_10(%arg0: i32) -> (i32, i32) {
    %c0_i32 = arith.constant 0 : i32
    %c0_i32_0 = arith.constant 0 : i32
    %c0_i32_1 = arith.constant 0 : i32
    return %c0_i32, %c0_i32_0 : i32, i32
  }
  func.func @transform_11(%arg0: i32) -> (i32, i32) {
    %c0_i32 = arith.constant 0 : i32
    %c0_i32_0 = arith.constant 0 : i32
    %c0_i32_1 = arith.constant 0 : i32
    return %c0_i32, %c0_i32_0 : i32, i32
  }
  func.func @transform_12(%arg0: i32) -> (i32, i32) {
    %c0_i32 = arith.constant 0 : i32
    %c0_i32_0 = arith.constant 0 : i32
    %c0_i32_1 = arith.constant 0 : i32
    return %c0_i32, %c0_i32_0 : i32, i32
  }
  func.func @transform_13(%arg0: i32) -> (i32, i32, i32) {
    %c0_i32 = arith.constant 0 : i32
    %c0_i32_0 = arith.constant 0 : i32
    %c0_i32_1 = arith.constant 0 : i32
    return %arg0, %c0_i32, %c0_i32_0 : i32, i32, i32
  }
}

</mosaic_0001>

<llo_original>
// kernel: net_forward.1
$region0: #{net_forward.1}
  #allocation0 [shape = 'u32[]', space=smem, size = 0x4, offset = 0x4, fixed_abs, tag = 'smem constant byte address 0x4 - core index']
  #allocation1 [shape = 'u32[72,128]{1,0:T(1,128)}', space=vmem, size = 0x9000, scoped, tag = 'internal scratch']
  #allocation2 [shape = 'f32[28,84]{1,0:T(8,128)}', space=vmem, size = 0x4000, scoped, tag = 'scratch operand']
  #allocation3 [shape = 'f32[28,84]{1,0:T(8,128)}', space=vmem, size = 0x4000, scoped, tag = 'scratch operand']
  #allocation4 [shape = 'f32[10,80]{1,0:T(8,128)}', space=vmem, size = 0x2000, scoped, tag = 'scratch operand']
  #allocation5 [shape = 'f32[10,80]{1,0:T(8,128)}', space=vmem, size = 0x2000, scoped, tag = 'scratch operand']
  %s0 = inlined_call_operand.vmem [shape: f32[2,32,96], index: 0, kind: input, shape index: {}]
  %s1 = inlined_call_operand.vmem [shape: f32[5,96,84], index: 1, kind: input, shape index: {}]
  %s2 = inlined_call_operand.vmem [shape: f32[5,96,84], index: 2, kind: input, shape index: {}]
  %s3 = inlined_call_operand.vmem [shape: f32[1,84], index: 3, kind: input, shape index: {}]
  %s4 = inlined_call_operand.vmem [shape: f32[5,84,80], index: 4, kind: input, shape index: {}]
  %s5 = inlined_call_operand.vmem [shape: f32[5,84,80], index: 5, kind: input, shape index: {}]
  %s6 = inlined_call_operand.vmem [shape: f32[1,80], index: 6, kind: input, shape index: {}]
  %s7 = inlined_call_operand.vmem [shape: f32[5,80,128], index: 7, kind: input, shape index: {}]
  %s8 = inlined_call_operand.vmem [shape: f32[1,128], index: 8, kind: input, shape index: {}]
  %s9 = inlined_call_operand.vmem [shape: f32[128,128], index: 9, kind: input, shape index: {}]
  %s10 = inlined_call_operand.vmem [shape: f32[1,128], index: 10, kind: input, shape index: {}]
  %s11 = inlined_call_operand.vmem [shape: f32[128,128], index: 11, kind: input, shape index: {}]
  %s12 = inlined_call_operand.vmem [shape: f32[1,128], index: 12, kind: input, shape index: {}]
  %s13 = inlined_call_operand.hbm [shape: f32[2,1,128], index: 13, kind: output, shape index: {}]
  %s14 = sld [smem:[#allocation0]]
  $region85: #{net_forward.1} parent=0
    _
  %s16 = ssub.s32 1, %s14
  %s17 = scalar_select 0, %s16, %s14
  $region1: #{net_forward.1} parent=0
    #allocation6 [shape = 'u8[1024]{0}', space=vmem, size = 0x400, scoped, tag = 'output window, operand 0']
    #allocation7 [shape = 's32[2]{0}', space=sflag, size = 0x8, scoped, tag = 'scoped memory for net_forward.1']
    %18 = vsyncpa [#allocation7], 0
    %s19 = scalar_lea.sflag [#allocation7], 1
    %20 = vsyncpa %s19, 0
    loop: start=0, step=1, limit=4
    $region2: #{net_forward.1} parent=1 // loop_pre_header
      _
    $region3: #{net_forward.1} parent=1 // loop_header
      %s22 = sphi 0, %s26
      %p23 = scmp.ge.s32.totalorder %s22, 4
      %s32 = sphi 0, %s34
      %s35 = sphi 0, %s32
      %s36 = sphi 0, %s35
      %s52 = sphi 0, %s36
      %s56 = sphi 0, %s56
      %s58 = sphi 0, %s56
      %s59 = sphi 0, %s58
      %s73 = sphi 0, %s59
      %s77 = sphi 0, %s77
      %s79 = sphi 0, %s77
      %s80 = sphi 0, %s79
      %s94 = sphi 0, %s80
      %s98 = sphi 0, %s98
      %s100 = sphi 0, %s98
      %s101 = sphi 0, %s100
      %s115 = sphi 0, %s101
      %s119 = sphi 0, %s119
      %s121 = sphi 0, %s119
      %s122 = sphi 0, %s121
      %s136 = sphi 0, %s122
      %s140 = sphi 0, %s140
      %s142 = sphi 0, %s140
      %s143 = sphi 0, %s142
      %s157 = sphi 0, %s143
      %s161 = sphi 0, %s161
      %s163 = sphi 0, %s161
      %s164 = sphi 0, %s163
      %s178 = sphi 0, %s164
      %s182 = sphi 0, %s182
      %s184 = sphi 0, %s182
      %s185 = sphi 0, %s184
      %s199 = sphi 0, %s185
      %s203 = sphi 0, %s203
      %s205 = sphi 0, %s203
      %s206 = sphi 0, %s205
      %s220 = sphi 0, %s206
      %s224 = sphi 0, %s224
      %s226 = sphi 0, %s224
      %s227 = sphi 0, %s226
      %s241 = sphi 0, %s227
      %s245 = sphi 0, %s245
      %s247 = sphi 0, %s245
      %s248 = sphi 0, %s247
      %s262 = sphi 0, %s248
      %s266 = sphi 0, %s266
      %s268 = sphi 0, %s266
      %s269 = sphi 0, %s268
      %s283 = sphi 0, %s269
      %s287 = sphi 0, %s287
      %s289 = sphi 0, %s287
      %s290 = sphi 0, %s289
      %s304 = sphi 0, %s290
      %s310 = sphi 0, %s312
      %s313 = sphi 0, %s310
      %s314 = sphi 0, %s313
      %s330 = sphi 0, %s314
    $region4: #{net_forward.1} parent=1 // loop_header_branch
      %25 = sbr.rel (%p23) target = $region8
    $region5: #{net_forward.1} parent=1 // loop_body
      %s27 = ssub.s32 %s22, 1
      %s28 = ssub.s32 %s22, 2
      %s29 = sadd.s32 %s22, 1
      %s30 = ssub.s32 %s22, %s29
      %p31 = scmp.eq.s32.totalorder %s30, 0
      %s33 = sadd.s32 %s32, 1
      %s34 = scalar_select %p31, %s32, %s33
      %p37 = pneg %p31
      %p38 = scmp.eq.s32.totalorder %s22, 1
      %p39 = por %p37, %p38
      %p40 = scmp.ne.s32.totalorder %s32, %s35
      %p41 = scmp.eq.s32.totalorder %s22, 0
      %p42 = por %p40, %p41
      %p43 = scmp.ne.s32.totalorder %s32, %s35
      %p44 = scmp.eq.s32.totalorder %s27, 1
      %p45 = por %p43, %p44
      %p46 = scmp.ne.s32.totalorder %s35, %s36
      %p47 = scmp.eq.s32.totalorder %s27, 0
      %p48 = por %p46, %p47
      %p49 = scmp.ne.s32.totalorder %s35, %s36
      %p50 = scmp.eq.s32.totalorder %s28, 1
      %p51 = por %p49, %p50
      %p53 = scmp.ne.s32.totalorder %s36, %s52
      %p54 = scmp.eq.s32.totalorder %s28, 0
      %p55 = por %p53, %p54
      %s57 = sadd.s32 %s56, 1
      %p60 = scmp.eq.s32.totalorder %s22, 1
      %p61 = scmp.ne.s32.totalorder %s56, %s58
      %p62 = scmp.eq.s32.totalorder %s22, 0
      %p63 = por %p61, %p62
      %p64 = scmp.ne.s32.totalorder %s56, %s58
      %p65 = scmp.eq.s32.totalorder %s27, 1
      %p66 = por %p64, %p65
      %p67 = scmp.ne.s32.totalorder %s58, %s59
      %p68 = scmp.eq.s32.totalorder %s27, 0
      %p69 = por %p67, %p68
      %p70 = scmp.ne.s32.totalorder %s58, %s59
      %p71 = scmp.eq.s32.totalorder %s28, 1
      %p72 = por %p70, %p71
      %p74 = scmp.ne.s32.totalorder %s59, %s73
      %p75 = scmp.eq.s32.totalorder %s28, 0
      %p76 = por %p74, %p75
      %s78 = sadd.s32 %s77, 1
      %p81 = scmp.eq.s32.totalorder %s22, 1
      %p82 = scmp.ne.s32.totalorder %s77, %s79
      %p83 = scmp.eq.s32.totalorder %s22, 0
      %p84 = por %p82, %p83
      %p85 = scmp.ne.s32.totalorder %s77, %s79
      %p86 = scmp.eq.s32.totalorder %s27, 1
      %p87 = por %p85, %p86
      %p88 = scmp.ne.s32.totalorder %s79, %s80
      %p89 = scmp.eq.s32.totalorder %s27, 0
      %p90 = por %p88, %p89
      %p91 = scmp.ne.s32.totalorder %s79, %s80
      %p92 = scmp.eq.s32.totalorder %s28, 1
      %p93 = por %p91, %p92
      %p95 = scmp.ne.s32.totalorder %s80, %s94
      %p96 = scmp.eq.s32.totalorder %s28, 0
      %p97 = por %p95, %p96
      %s99 = sadd.s32 %s98, 1
      %p102 = scmp.eq.s32.totalorder %s22, 1
      %p103 = scmp.ne.s32.totalorder %s98, %s100
      %p104 = scmp.eq.s32.totalorder %s22, 0
      %p105 = por %p103, %p104
      %p106 = scmp.ne.s32.totalorder %s98, %s100
      %p107 = scmp.eq.s32.totalorder %s27, 1
      %p108 = por %p106, %p107
      %p109 = scmp.ne.s32.totalorder %s100, %s101
      %p110 = scmp.eq.s32.totalorder %s27, 0
      %p111 = por %p109, %p110
      %p112 = scmp.ne.s32.totalorder %s100, %s101
      %p113 = scmp.eq.s32.totalorder %s28, 1
      %p114 = por %p112, %p113
      %p116 = scmp.ne.s32.totalorder %s101, %s115
      %p117 = scmp.eq.s32.totalorder %s28, 0
      %p118 = por %p116, %p117
      %s120 = sadd.s32 %s119, 1
      %p123 = scmp.eq.s32.totalorder %s22, 1
      %p124 = scmp.ne.s32.totalorder %s119, %s121
      %p125 = scmp.eq.s32.totalorder %s22, 0
      %p126 = por %p124, %p125
      %p127 = scmp.ne.s32.totalorder %s119, %s121
      %p128 = scmp.eq.s32.totalorder %s27, 1
      %p129 = por %p127, %p128
      %p130 = scmp.ne.s32.totalorder %s121, %s122
      %p131 = scmp.eq.s32.totalorder %s27, 0
      %p132 = por %p130, %p131
      %p133 = scmp.ne.s32.totalorder %s121, %s122
      %p134 = scmp.eq.s32.totalorder %s28, 1
      %p135 = por %p133, %p134
      %p137 = scmp.ne.s32.totalorder %s122, %s136
      %p138 = scmp.eq.s32.totalorder %s28, 0
      %p139 = por %p137, %p138
      %s141 = sadd.s32 %s140, 1
      %p144 = scmp.eq.s32.totalorder %s22, 1
      %p145 = scmp.ne.s32.totalorder %s140, %s142
      %p146 = scmp.eq.s32.totalorder %s22, 0
      %p147 = por %p145, %p146
      %p148 = scmp.ne.s32.totalorder %s140, %s142
      %p149 = scmp.eq.s32.totalorder %s27, 1
      %p150 = por %p148, %p149
      %p151 = scmp.ne.s32.totalorder %s142, %s143
      %p152 = scmp.eq.s32.totalorder %s27, 0
      %p153 = por %p151, %p152
      %p154 = scmp.ne.s32.totalorder %s142, %s143
      %p155 = scmp.eq.s32.totalorder %s28, 1
      %p156 = por %p154, %p155
      %p158 = scmp.ne.s32.totalorder %s143, %s157
      %p159 = scmp.eq.s32.totalorder %s28, 0
      %p160 = por %p158, %p159
      %s162 = sadd.s32 %s161, 1
      %p165 = scmp.eq.s32.totalorder %s22, 1
      %p166 = scmp.ne.s32.totalorder %s161, %s163
      %p167 = scmp.eq.s32.totalorder %s22, 0
      %p168 = por %p166, %p167
      %p169 = scmp.ne.s32.totalorder %s161, %s163
      %p170 = scmp.eq.s32.totalorder %s27, 1
      %p171 = por %p169, %p170
      %p172 = scmp.ne.s32.totalorder %s163, %s164
      %p173 = scmp.eq.s32.totalorder %s27, 0
      %p174 = por %p172, %p173
      %p175 = scmp.ne.s32.totalorder %s163, %s164
      %p176 = scmp.eq.s32.totalorder %s28, 1
      %p177 = por %p175, %p176
      %p179 = scmp.ne.s32.totalorder %s164, %s178
      %p180 = scmp.eq.s32.totalorder %s28, 0
      %p181 = por %p179, %p180
      %s183 = sadd.s32 %s182, 1
      %p186 = scmp.eq.s32.totalorder %s22, 1
      %p187 = scmp.ne.s32.totalorder %s182, %s184
      %p188 = scmp.eq.s32.totalorder %s22, 0
      %p189 = por %p187, %p188
      %p190 = scmp.ne.s32.totalorder %s182, %s184
      %p191 = scmp.eq.s32.totalorder %s27, 1
      %p192 = por %p190, %p191
      %p193 = scmp.ne.s32.totalorder %s184, %s185
      %p194 = scmp.eq.s32.totalorder %s27, 0
      %p195 = por %p193, %p194
      %p196 = scmp.ne.s32.totalorder %s184, %s185
      %p197 = scmp.eq.s32.totalorder %s28, 1
      %p198 = por %p196, %p197
      %p200 = scmp.ne.s32.totalorder %s185, %s199
      %p201 = scmp.eq.s32.totalorder %s28, 0
      %p202 = por %p200, %p201
      %s204 = sadd.s32 %s203, 1
      %p207 = scmp.eq.s32.totalorder %s22, 1
      %p208 = scmp.ne.s32.totalorder %s203, %s205
      %p209 = scmp.eq.s32.totalorder %s22, 0
      %p210 = por %p208, %p209
      %p211 = scmp.ne.s32.totalorder %s203, %s205
      %p212 = scmp.eq.s32.totalorder %s27, 1
      %p213 = por %p211, %p212
      %p214 = scmp.ne.s32.totalorder %s205, %s206
      %p215 = scmp.eq.s32.totalorder %s27, 0
      %p216 = por %p214, %p215
      %p217 = scmp.ne.s32.totalorder %s205, %s206
      %p218 = scmp.eq.s32.totalorder %s28, 1
      %p219 = por %p217, %p218
      %p221 = scmp.ne.s32.totalorder %s206, %s220
      %p222 = scmp.eq.s32.totalorder %s28, 0
      %p223 = por %p221, %p222
      %s225 = sadd.s32 %s224, 1
      %p228 = scmp.eq.s32.totalorder %s22, 1
      %p229 = scmp.ne.s32.totalorder %s224, %s226
      %p230 = scmp.eq.s32.totalorder %s22, 0
      %p231 = por %p229, %p230
      %p232 = scmp.ne.s32.totalorder %s224, %s226
      %p233 = scmp.eq.s32.totalorder %s27, 1
      %p234 = por %p232, %p233
      %p235 = scmp.ne.s32.totalorder %s226, %s227
      %p236 = scmp.eq.s32.totalorder %s27, 0
      %p237 = por %p235, %p236
      %p238 = scmp.ne.s32.totalorder %s226, %s227
      %p239 = scmp.eq.s32.totalorder %s28, 1
      %p240 = por %p238, %p239
      %p242 = scmp.ne.s32.totalorder %s227, %s241
      %p243 = scmp.eq.s32.totalorder %s28, 0
      %p244 = por %p242, %p243
      %s246 = sadd.s32 %s245, 1
      %p249 = scmp.eq.s32.totalorder %s22, 1
      %p250 = scmp.ne.s32.totalorder %s245, %s247
      %p251 = scmp.eq.s32.totalorder %s22, 0
      %p252 = por %p250, %p251
      %p253 = scmp.ne.s32.totalorder %s245, %s247
      %p254 = scmp.eq.s32.totalorder %s27, 1
      %p255 = por %p253, %p254
      %p256 = scmp.ne.s32.totalorder %s247, %s248
      %p257 = scmp.eq.s32.totalorder %s27, 0
      %p258 = por %p256, %p257
      %p259 = scmp.ne.s32.totalorder %s247, %s248
      %p260 = scmp.eq.s32.totalorder %s28, 1
      %p261 = por %p259, %p260
      %p263 = scmp.ne.s32.totalorder %s248, %s262
      %p264 = scmp.eq.s32.totalorder %s28, 0
      %p265 = por %p263, %p264
      %s267 = sadd.s32 %s266, 1
      %p270 = scmp.eq.s32.totalorder %s22, 1
      %p271 = scmp.ne.s32.totalorder %s266, %s268
      %p272 = scmp.eq.s32.totalorder %s22, 0
      %p273 = por %p271, %p272
      %p274 = scmp.ne.s32.totalorder %s266, %s268
      %p275 = scmp.eq.s32.totalorder %s27, 1
      %p276 = por %p274, %p275
      %p277 = scmp.ne.s32.totalorder %s268, %s269
      %p278 = scmp.eq.s32.totalorder %s27, 0
      %p279 = por %p277, %p278
      %p280 = scmp.ne.s32.totalorder %s268, %s269
      %p281 = scmp.eq.s32.totalorder %s28, 1
      %p282 = por %p280, %p281
      %p284 = scmp.ne.s32.totalorder %s269, %s283
      %p285 = scmp.eq.s32.totalorder %s28, 0
      %p286 = por %p284, %p285
      %s288 = sadd.s32 %s287, 1
      %p291 = scmp.eq.s32.totalorder %s22, 1
      %p292 = scmp.ne.s32.totalorder %s287, %s289
      %p293 = scmp.eq.s32.totalorder %s22, 0
      %p294 = por %p292, %p293
      %p295 = scmp.ne.s32.totalorder %s287, %s289
      %p296 = scmp.eq.s32.totalorder %s27, 1
      %p297 = por %p295, %p296
      %p298 = scmp.ne.s32.totalorder %s289, %s290
      %p299 = scmp.eq.s32.totalorder %s27, 0
      %p300 = por %p298, %p299
      %p301 = scmp.ne.s32.totalorder %s289, %s290
      %p302 = scmp.eq.s32.totalorder %s28, 1
      %p303 = por %p301, %p302
      %p305 = scmp.ne.s32.totalorder %s290, %s304
      %p306 = scmp.eq.s32.totalorder %s28, 0
      %p307 = por %p305, %p306
      %s308 = ssub.s32 %s22, %s29
      %p309 = scmp.eq.s32.totalorder %s308, 0
      %s311 = sadd.s32 %s310, 1
      %s312 = scalar_select %p309, %s310, %s311
      %p315 = pneg %p309
      %p316 = scmp.eq.s32.totalorder %s22, 1
      %p317 = por %p315, %p316
      %p318 = scmp.ne.s32.totalorder %s310, %s313
      %p319 = scmp.eq.s32.totalorder %s22, 0
      %p320 = por %p318, %p319
      %p321 = scmp.ne.s32.totalorder %s310, %s313
      %p322 = scmp.eq.s32.totalorder %s27, 1
      %p323 = por %p321, %p322
      %p324 = scmp.ne.s32.totalorder %s313, %s314
      %p325 = scmp.eq.s32.totalorder %s27, 0
      %p326 = por %p324, %p325
      %p327 = scmp.ne.s32.totalorder %s313, %s314
      %p328 = scmp.eq.s32.totalorder %s28, 1
      %p329 = por %p327, %p328
      %p331 = scmp.ne.s32.totalorder %s314, %s330
      %p332 = scmp.eq.s32.totalorder %s28, 0
      %p333 = por %p331, %p332
      %p334 = scmp.le.s32.totalorder 1, %s22
      %p335 = scmp.lt.s32.totalorder %s22, 3
      %p336 = pnand %p334, %p335
      %p337 = pneg %p336
      // Predicated region
      $region9: #{net_forward.1} parent=5 // pred_check
        _
      $region10: #{net_forward.1} parent=5 // pred_check_branch
        %339 = sbr.rel (%p336) target = $region12
      $region11: #{net_forward.1} parent=5 // pred_region
        %s340 = ssub.s32 %s22, 1
        // Predicated region
        $region13: #{net_forward.1} parent=11 // pred_check
          %p341 = pneg %p69
        $region14: #{net_forward.1} parent=11 // pred_check_branch
          %343 = sbr.rel (%p341) target = $region16
        $region15: #{net_forward.1} parent=11 // pred_region
          _
        $region16: #{net_forward.1} parent=11 // pred_fallthru
          _
        // Predicated region
        $region17: #{net_forward.1} parent=11 // pred_check
          %p344 = pneg %p90
        $region18: #{net_forward.1} parent=11 // pred_check_branch
          %346 = sbr.rel (%p344) target = $region20
        $region19: #{net_forward.1} parent=11 // pred_region
          _
        $region20: #{net_forward.1} parent=11 // pred_fallthru
          _
        // Predicated region
        $region21: #{net_forward.1} parent=11 // pred_check
          %p347 = pneg %p111
        $region22: #{net_forward.1} parent=11 // pred_check_branch
          %349 = sbr.rel (%p347) target = $region24
        $region23: #{net_forward.1} parent=11 // pred_region
          _
        $region24: #{net_forward.1} parent=11 // pred_fallthru
          _
        // Predicated region
        $region25: #{net_forward.1} parent=11 // pred_check
          %p350 = pneg %p132
        $region26: #{net_forward.1} parent=11 // pred_check_branch
          %352 = sbr.rel (%p350) target = $region28
        $region27: #{net_forward.1} parent=11 // pred_region
          _
        $region28: #{net_forward.1} parent=11 // pred_fallthru
          _
        // Predicated region
        $region29: #{net_forward.1} parent=11 // pred_check
          %p353 = pneg %p153
        $region30: #{net_forward.1} parent=11 // pred_check_branch
          %355 = sbr.rel (%p353) target = $region32
        $region31: #{net_forward.1} parent=11 // pred_region
          _
        $region32: #{net_forward.1} parent=11 // pred_fallthru
          _
        // Predicated region
        $region33: #{net_forward.1} parent=11 // pred_check
          %p356 = pneg %p174
        $region34: #{net_forward.1} parent=11 // pred_check_branch
          %358 = sbr.rel (%p356) target = $region36
        $region35: #{net_forward.1} parent=11 // pred_region
          _
        $region36: #{net_forward.1} parent=11 // pred_fallthru
          _
        // Predicated region
        $region37: #{net_forward.1} parent=11 // pred_check
          %p359 = pneg %p195
        $region38: #{net_forward.1} parent=11 // pred_check_branch
          %361 = sbr.rel (%p359) target = $region40
        $region39: #{net_forward.1} parent=11 // pred_region
          _
        $region40: #{net_forward.1} parent=11 // pred_fallthru
          _
        // Predicated region
        $region41: #{net_forward.1} parent=11 // pred_check
          %p362 = pneg %p216
        $region42: #{net_forward.1} parent=11 // pred_check_branch
          %364 = sbr.rel (%p362) target = $region44
        $region43: #{net_forward.1} parent=11 // pred_region
          _
        $region44: #{net_forward.1} parent=11 // pred_fallthru
          _
        // Predicated region
        $region45: #{net_forward.1} parent=11 // pred_check
          %p365 = pneg %p237
        $region46: #{net_forward.1} parent=11 // pred_check_branch
          %367 = sbr.rel (%p365) target = $region48
        $region47: #{net_forward.1} parent=11 // pred_region
          _
        $region48: #{net_forward.1} parent=11 // pred_fallthru
          _
        // Predicated region
        $region49: #{net_forward.1} parent=11 // pred_check
          %p368 = pneg %p258
        $region50: #{net_forward.1} parent=11 // pred_check_branch
          %370 = sbr.rel (%p368) target = $region52
        $region51: #{net_forward.1} parent=11 // pred_region
          _
        $region52: #{net_forward.1} parent=11 // pred_fallthru
          _
        // Predicated region
        $region53: #{net_forward.1} parent=11 // pred_check
          %p371 = pneg %p279
        $region54: #{net_forward.1} parent=11 // pred_check_branch
          %373 = sbr.rel (%p371) target = $region56
        $region55: #{net_forward.1} parent=11 // pred_region
          _
        $region56: #{net_forward.1} parent=11 // pred_fallthru
          _
        // Predicated region
        $region57: #{net_forward.1} parent=11 // pred_check
          %p374 = pneg %p300
        $region58: #{net_forward.1} parent=11 // pred_check_branch
          %376 = sbr.rel (%p374) target = $region60
        $region59: #{net_forward.1} parent=11 // pred_region
          _
        $region60: #{net_forward.1} parent=11 // pred_fallthru
          _
      $region12: #{net_forward.1} parent=5 // pred_fallthru
        _
      %p377 = scmp.lt.s32.totalorder %s22, 2
      // Predicated region
      $region61: #{net_forward.1} parent=5 // pred_check
        %p378 = pneg %p377
      $region62: #{net_forward.1} parent=5 // pred_check_branch
        %380 = sbr.rel (%p378) target = $region64
      $region63: #{net_forward.1} parent=5 // pred_region
        // Predicated region
        $region65: #{net_forward.1} parent=63 // pred_check
          %p381 = pneg %p42
        $region66: #{net_forward.1} parent=63 // pred_check_branch
          %383 = sbr.rel (%p381) target = $region68
        $region67: #{net_forward.1} parent=63 // pred_region
          %p384 = scmp.lt.s32.totalorder %s22, 1
          %s385 = scalar_select %p384, %s22, 1
          %s386 = smul.addr %s385, 4
          %s387 = smul.addr %s386, 8
          %s388 = scalar_lea.vmem %s0, %s387
        $region68: #{net_forward.1} parent=63 // pred_fallthru
          _
      $region64: #{net_forward.1} parent=5 // pred_fallthru
        _
      %p389 = scmp.le.s32.totalorder 1, %s22
      %p390 = scmp.lt.s32.totalorder %s22, 3
      %p391 = pnand %p389, %p390
      %p392 = pneg %p391
      // Predicated region
      $region69: #{net_forward.1} parent=5 // pred_check
        _
      $region70: #{net_forward.1} parent=5 // pred_check_branch
        %394 = sbr.rel (%p391) target = $region72
      $region71: #{net_forward.1} parent=5 // pred_region
        %s395 = ssub.s32 %s22, 1
        %p396 = scmp.lt.s32.totalorder %s27, 1
        %s397 = scalar_select %p396, %s27, 1
        %s398 = smul.addr %s397, 4
        %s399 = smul.addr %s398, 8
        %s400 = scalar_lea.vmem %s0, %s399
        %p401 = pneg %p48
        %p402 = pneg %p45
        %p403 = pneg %p69
        %p404 = pneg %p66
        %p405 = pneg %p90
        %p406 = pneg %p87
        %p407 = pneg %p111
        %p408 = pneg %p108
        %p409 = pneg %p132
        %p410 = pneg %p129
        %p411 = pneg %p153
        %p412 = pneg %p150
        %p413 = pneg %p174
        %p414 = pneg %p171
        %p415 = pneg %p195
        %p416 = pneg %p192
        %p417 = pneg %p216
        %p418 = pneg %p213
        %p419 = pneg %p237
        %p420 = pneg %p234
        %p421 = pneg %p258
        %p422 = pneg %p255
        %p423 = pneg %p279
        %p424 = pneg %p276
        %p425 = pneg %p300
        %p426 = pneg %p297
        %p427 = pneg %p326
        %p428 = pneg %p323
        %s429 = sand.u32 %s313, 1
        %s430 = scalar_lea.sflag [#allocation7], %s429
        %s431 = sand.u32 %s313, 1
        %s432 = scalar_lea.vmem [#allocation6], %s431
        %p433 = scmp.lt.s32.totalorder %s27, 1
        %s434 = scalar_select %p433, %s27, 1
        %s435 = smul.addr %s434, 4
        %s436 = smul.addr %s435, 8
        %s437 = scalar_lea.vmem %s0, %s436
        %v438 = vld [vmem:[%s437] sm:$0xff]
        %v439 = vld [vmem:[%s437 + $0x8] sm:$0xff]
        %v440 = vld [vmem:[%s437 + $0x10] sm:$0xff]
        %v441 = vld [vmem:[%s437 + $0x18] sm:$0xff]
        %v442 = vld [vmem:[%s1] sm:$0xff]
        %v443 = vld [vmem:[%s1 + $0x8] sm:$0xff]
        %v444 = vld [vmem:[%s1 + $0x10] sm:$0xff]
        %v445 = vld [vmem:[%s1 + $0x18] sm:$0xff]
        %v446 = vld [vmem:[%s1 + $0x20] sm:$0xff]
        %v447 = vld [vmem:[%s1 + $0x28] sm:$0xff]
        %v448 = vld [vmem:[%s1 + $0x30] sm:$0xff]
        %v449 = vld [vmem:[%s1 + $0x38] sm:$0xff]
        %v450 = vld [vmem:[%s1 + $0x40] sm:$0xff]
        %v451 = vld [vmem:[%s1 + $0x48] sm:$0xff]
        %v452 = vld [vmem:[%s1 + $0x50] sm:$0xff]
        %v453 = vld [vmem:[%s1 + $0x58] sm:$0xff]
        %v454 = vld [vmem:[%s2] sm:$0xff]
        %v455 = vld [vmem:[%s2 + $0x8] sm:$0xff]
        %v456 = vld [vmem:[%s2 + $0x10] sm:$0xff]
        %v457 = vld [vmem:[%s2 + $0x18] sm:$0xff]
        %v458 = vld [vmem:[%s2 + $0x20] sm:$0xff]
        %v459 = vld [vmem:[%s2 + $0x28] sm:$0xff]
        %v460 = vld [vmem:[%s2 + $0x30] sm:$0xff]
        %v461 = vld [vmem:[%s2 + $0x38] sm:$0xff]
        %v462 = vld [vmem:[%s2 + $0x40] sm:$0xff]
        %v463 = vld [vmem:[%s2 + $0x48] sm:$0xff]
        %v464 = vld [vmem:[%s2 + $0x50] sm:$0xff]
        %v465 = vld [vmem:[%s2 + $0x58] sm:$0xff]
        %s466 = scalar_lea.vmem %s1, 96
        %v467 = vld [vmem:[%s466] sm:$0xff]
        %v468 = vld [vmem:[%s466 + $0x8] sm:$0xff]
        %v469 = vld [vmem:[%s466 + $0x10] sm:$0xff]
        %v470 = vld [vmem:[%s466 + $0x18] sm:$0xff]
        %v471 = vld [vmem:[%s466 + $0x20] sm:$0xff]
        %v472 = vld [vmem:[%s466 + $0x28] sm:$0xff]
        %v473 = vld [vmem:[%s466 + $0x30] sm:$0xff]
        %v474 = vld [vmem:[%s466 + $0x38] sm:$0xff]
        %v475 = vld [vmem:[%s466 + $0x40] sm:$0xff]
        %v476 = vld [vmem:[%s466 + $0x48] sm:$0xff]
        %v477 = vld [vmem:[%s466 + $0x50] sm:$0xff]
        %v478 = vld [vmem:[%s466 + $0x58] sm:$0xff]
        %vm483 = vcmask 1046528
        %v484 = vrot.slane %v438, 1
        %v485 = vrot.slane %v439, 1
        %v486 = vsel %vm483, %v484, %v485
        %v487 = vrot.slane %v440, 1
        %v488 = vsel %vm483, %v485, %v487
        %v489 = vrot.slane %v441, 1
        %v490 = vsel %vm483, %v487, %v489
        %vm491 = vcmask 785408
        %v492 = vsel %vm491, %v486, 0
        %v494 = vsel %vm491, %v488, 0
        %v496 = vsel %vm491, %v490, 0
        %v498 = vsel %vm491, %v489, 0
        %500 = vmatpush.msra.mxu0 0.0
        %501 = vmatpush.msra.mxu0 0.0
        %502 = vmatpush.msra.mxu0 0.0
        %503 = vmatpush.msra.mxu0 0.0
        %504 = vmatpush.msra.mxu0 %v478
        %505 = vmatpush.msra.mxu0 %v477
        %506 = vmatpush.msra.mxu0 %v476
        %507 = vmatpush.msra.mxu0 %v475
        %508 = vmatpush.msra.mxu0 %v474
        %509 = vmatpush.msra.mxu0 %v473
        %510 = vmatpush.msra.mxu0 %v472
        %511 = vmatpush.msra.mxu0 %v471
        %512 = vmatpush.msra.mxu0 %v470
        %513 = vmatpush.msra.mxu0 %v469
        %514 = vmatpush.msra.mxu0 %v468
        %515 = vmatpush.msra.mxu0 %v467
        %516 = vmatmul.f32.gmra.mxu0 %v492
        %v517 = vpop.f32.mrf.mxu0
        %v518 = vadd.f32 0.0, %v517
        %519 = vmatmul.f32.gmra.mxu0 %v494
        %v520 = vpop.f32.mrf.mxu0
        %v521 = vadd.f32 0.0, %v520
        %522 = vmatmul.f32.gmra.mxu0 %v496
        %v523 = vpop.f32.mrf.mxu0
        %v524 = vadd.f32 0.0, %v523
        %525 = vmatmul.f32.gmra.mxu0 %v498
        %v526 = vpop.f32.mrf.mxu0
        %v527 = vadd.f32 0.0, %v526
        %528 = vdwg.mxu0
        %v529 = vsel %vm491, %v438, 0
        %v531 = vsel %vm491, %v439, 0
        %v533 = vsel %vm491, %v440, 0
        %v535 = vsel %vm491, %v441, 0
        %537 = vmatpush.msra.mxu0 0.0
        %538 = vmatpush.msra.mxu0 0.0
        %539 = vmatpush.msra.mxu0 0.0
        %540 = vmatpush.msra.mxu0 0.0
        %541 = vmatpush.msra.mxu0 %v453
        %542 = vmatpush.msra.mxu0 %v452
        %543 = vmatpush.msra.mxu0 %v451
        %544 = vmatpush.msra.mxu0 %v450
        %545 = vmatpush.msra.mxu0 %v449
        %546 = vmatpush.msra.mxu0 %v448
        %547 = vmatpush.msra.mxu0 %v447
        %548 = vmatpush.msra.mxu0 %v446
        %549 = vmatpush.msra.mxu0 %v445
        %550 = vmatpush.msra.mxu0 %v444
        %551 = vmatpush.msra.mxu0 %v443
        %552 = vmatpush.msra.mxu0 %v442
        %553 = vmatmul.f32.gmra.mxu0 %v529
        %v554 = vpop.f32.mrf.mxu0
        %v555 = vadd.f32 %v518, %v554
        %556 = vmatmul.f32.gmra.mxu0 %v531
        %v557 = vpop.f32.mrf.mxu0
        %v558 = vadd.f32 %v521, %v557
        %559 = vmatmul.f32.gmra.mxu0 %v533
        %v560 = vpop.f32.mrf.mxu0
        %v561 = vadd.f32 %v524, %v560
        %562 = vmatmul.f32.gmra.mxu0 %v535
        %v563 = vpop.f32.mrf.mxu0
        %v564 = vadd.f32 %v527, %v563
        %565 = vdwg.mxu0
        %s566 = scalar_lea.vmem %s2, 96
        %v567 = vld [vmem:[%s566] sm:$0xff]
        %v568 = vld [vmem:[%s566 + $0x8] sm:$0xff]
        %v569 = vld [vmem:[%s566 + $0x10] sm:$0xff]
        %v570 = vld [vmem:[%s566 + $0x18] sm:$0xff]
        %v571 = vld [vmem:[%s566 + $0x20] sm:$0xff]
        %v572 = vld [vmem:[%s566 + $0x28] sm:$0xff]
        %v573 = vld [vmem:[%s566 + $0x30] sm:$0xff]
        %v574 = vld [vmem:[%s566 + $0x38] sm:$0xff]
        %v575 = vld [vmem:[%s566 + $0x40] sm:$0xff]
        %v576 = vld [vmem:[%s566 + $0x48] sm:$0xff]
        %v577 = vld [vmem:[%s566 + $0x50] sm:$0xff]
        %v578 = vld [vmem:[%s566 + $0x58] sm:$0xff]
        %579 = vmatpush.msra.mxu0 0.0
        %580 = vmatpush.msra.mxu0 0.0
        %581 = vmatpush.msra.mxu0 0.0
        %582 = vmatpush.msra.mxu0 0.0
        %583 = vmatpush.msra.mxu0 %v578
        %584 = vmatpush.msra.mxu0 %v577
        %585 = vmatpush.msra.mxu0 %v576
        %586 = vmatpush.msra.mxu0 %v575
        %587 = vmatpush.msra.mxu0 %v574
        %588 = vmatpush.msra.mxu0 %v573
        %589 = vmatpush.msra.mxu0 %v572
        %590 = vmatpush.msra.mxu0 %v571
        %591 = vmatpush.msra.mxu0 %v570
        %592 = vmatpush.msra.mxu0 %v569
        %593 = vmatpush.msra.mxu0 %v568
        %594 = vmatpush.msra.mxu0 %v567
        %595 = vmatmul.f32.gmra.mxu0 %v492
        %v596 = vpop.f32.mrf.mxu0
        %v597 = vadd.f32 0.0, %v596
        %598 = vmatmul.f32.gmra.mxu0 %v494
        %v599 = vpop.f32.mrf.mxu0
        %v600 = vadd.f32 0.0, %v599
        %601 = vmatmul.f32.gmra.mxu0 %v496
        %v602 = vpop.f32.mrf.mxu0
        %v603 = vadd.f32 0.0, %v602
        %604 = vmatmul.f32.gmra.mxu0 %v498
        %v605 = vpop.f32.mrf.mxu0
        %v606 = vadd.f32 0.0, %v605
        %607 = vdwg.mxu0
        %608 = vmatpush.msra.mxu0 0.0
        %609 = vmatpush.msra.mxu0 0.0
        %610 = vmatpush.msra.mxu0 0.0
        %611 = vmatpush.msra.mxu0 0.0
        %612 = vmatpush.msra.mxu0 %v465
        %613 = vmatpush.msra.mxu0 %v464
        %614 = vmatpush.msra.mxu0 %v463
        %615 = vmatpush.msra.mxu0 %v462
        %616 = vmatpush.msra.mxu0 %v461
        %617 = vmatpush.msra.mxu0 %v460
        %618 = vmatpush.msra.mxu0 %v459
        %619 = vmatpush.msra.mxu0 %v458
        %620 = vmatpush.msra.mxu0 %v457
        %621 = vmatpush.msra.mxu0 %v456
        %622 = vmatpush.msra.mxu0 %v455
        %623 = vmatpush.msra.mxu0 %v454
        %624 = vmatmul.f32.gmra.mxu0 %v529
        %v625 = vpop.f32.mrf.mxu0
        %v626 = vadd.f32 %v597, %v625
        %627 = vmatmul.f32.gmra.mxu0 %v531
        %v628 = vpop.f32.mrf.mxu0
        %v629 = vadd.f32 %v600, %v628
        %630 = vmatmul.f32.gmra.mxu0 %v533
        %v631 = vpop.f32.mrf.mxu0
        %v632 = vadd.f32 %v603, %v631
        %633 = vmatmul.f32.gmra.mxu0 %v535
        %v634 = vpop.f32.mrf.mxu0
        %v635 = vadd.f32 %v606, %v634
        %636 = vdwg.mxu0
        %s637 = scalar_lea.vmem %s1, 192
        %v638 = vld [vmem:[%s637] sm:$0xff]
        %v639 = vld [vmem:[%s637 + $0x8] sm:$0xff]
        %v640 = vld [vmem:[%s637 + $0x10] sm:$0xff]
        %v641 = vld [vmem:[%s637 + $0x18] sm:$0xff]
        %v642 = vld [vmem:[%s637 + $0x20] sm:$0xff]
        %v643 = vld [vmem:[%s637 + $0x28] sm:$0xff]
        %v644 = vld [vmem:[%s637 + $0x30] sm:$0xff]
        %v645 = vld [vmem:[%s637 + $0x38] sm:$0xff]
        %v646 = vld [vmem:[%s637 + $0x40] sm:$0xff]
        %v647 = vld [vmem:[%s637 + $0x48] sm:$0xff]
        %v648 = vld [vmem:[%s637 + $0x50] sm:$0xff]
        %v649 = vld [vmem:[%s637 + $0x58] sm:$0xff]
        %vm650 = vcmask 1045504
        %v651 = vrot.slane %v438, 2
        %v652 = vrot.slane %v439, 2
        %v653 = vsel %vm650, %v651, %v652
        %v654 = vrot.slane %v440, 2
        %v655 = vsel %vm650, %v652, %v654
        %v656 = vrot.slane %v441, 2
        %v657 = vsel %vm650, %v654, %v656
        %v658 = vsel %vm491, %v653, 0
        %v660 = vsel %vm491, %v655, 0
        %v662 = vsel %vm491, %v657, 0
        %v664 = vsel %vm491, %v656, 0
        %666 = vmatpush.msra.mxu0 0.0
        %667 = vmatpush.msra.mxu0 0.0
        %668 = vmatpush.msra.mxu0 0.0
        %669 = vmatpush.msra.mxu0 0.0
        %670 = vmatpush.msra.mxu0 %v649
        %671 = vmatpush.msra.mxu0 %v648
        %672 = vmatpush.msra.mxu0 %v647
        %673 = vmatpush.msra.mxu0 %v646
        %674 = vmatpush.msra.mxu0 %v645
        %675 = vmatpush.msra.mxu0 %v644
        %676 = vmatpush.msra.mxu0 %v643
        %677 = vmatpush.msra.mxu0 %v642
        %678 = vmatpush.msra.mxu0 %v641
        %679 = vmatpush.msra.mxu0 %v640
        %680 = vmatpush.msra.mxu0 %v639
        %681 = vmatpush.msra.mxu0 %v638
        %682 = vmatmul.f32.gmra.mxu0 %v658
        %v683 = vpop.f32.mrf.mxu0
        %v684 = vadd.f32 0.0, %v683
        %685 = vmatmul.f32.gmra.mxu0 %v660
        %v686 = vpop.f32.mrf.mxu0
        %v687 = vadd.f32 0.0, %v686
        %688 = vmatmul.f32.gmra.mxu0 %v662
        %v689 = vpop.f32.mrf.mxu0
        %v690 = vadd.f32 0.0, %v689
        %691 = vmatmul.f32.gmra.mxu0 %v664
        %v692 = vpop.f32.mrf.mxu0
        %v693 = vadd.f32 0.0, %v692
        %694 = vdwg.mxu0
        %v695 = vadd.f32 %v555, %v684
        %v696 = vadd.f32 %v558, %v687
        %v697 = vadd.f32 %v561, %v690
        %v698 = vadd.f32 %v564, %v693
        %s699 = scalar_lea.vmem %s2, 192
        %v700 = vld [vmem:[%s699] sm:$0xff]
        %v701 = vld [vmem:[%s699 + $0x8] sm:$0xff]
        %v702 = vld [vmem:[%s699 + $0x10] sm:$0xff]
        %v703 = vld [vmem:[%s699 + $0x18] sm:$0xff]
        %v704 = vld [vmem:[%s699 + $0x20] sm:$0xff]
        %v705 = vld [vmem:[%s699 + $0x28] sm:$0xff]
        %v706 = vld [vmem:[%s699 + $0x30] sm:$0xff]
        %v707 = vld [vmem:[%s699 + $0x38] sm:$0xff]
        %v708 = vld [vmem:[%s699 + $0x40] sm:$0xff]
        %v709 = vld [vmem:[%s699 + $0x48] sm:$0xff]
        %v710 = vld [vmem:[%s699 + $0x50] sm:$0xff]
        %v711 = vld [vmem:[%s699 + $0x58] sm:$0xff]
        %712 = vmatpush.msra.mxu0 0.0
        %713 = vmatpush.msra.mxu0 0.0
        %714 = vmatpush.msra.mxu0 0.0
        %715 = vmatpush.msra.mxu0 0.0
        %716 = vmatpush.msra.mxu0 %v711
        %717 = vmatpush.msra.mxu0 %v710
        %718 = vmatpush.msra.mxu0 %v709
        %719 = vmatpush.msra.mxu0 %v708
        %720 = vmatpush.msra.mxu0 %v707
        %721 = vmatpush.msra.mxu0 %v706
        %722 = vmatpush.msra.mxu0 %v705
        %723 = vmatpush.msra.mxu0 %v704
        %724 = vmatpush.msra.mxu0 %v703
        %725 = vmatpush.msra.mxu0 %v702
        %726 = vmatpush.msra.mxu0 %v701
        %727 = vmatpush.msra.mxu0 %v700
        %728 = vmatmul.f32.gmra.mxu0 %v658
        %v729 = vpop.f32.mrf.mxu0
        %v730 = vadd.f32 0.0, %v729
        %731 = vmatmul.f32.gmra.mxu0 %v660
        %v732 = vpop.f32.mrf.mxu0
        %v733 = vadd.f32 0.0, %v732
        %734 = vmatmul.f32.gmra.mxu0 %v662
        %v735 = vpop.f32.mrf.mxu0
        %v736 = vadd.f32 0.0, %v735
        %737 = vmatmul.f32.gmra.mxu0 %v664
        %v738 = vpop.f32.mrf.mxu0
        %v739 = vadd.f32 0.0, %v738
        %740 = vdwg.mxu0
        %v741 = vadd.f32 %v626, %v730
        %v742 = vadd.f32 %v629, %v733
        %v743 = vadd.f32 %v632, %v736
        %v744 = vadd.f32 %v635, %v739
        %s745 = scalar_lea.vmem %s1, 288
        %v746 = vld [vmem:[%s745] sm:$0xff]
        %v747 = vld [vmem:[%s745 + $0x8] sm:$0xff]
        %v748 = vld [vmem:[%s745 + $0x10] sm:$0xff]
        %v749 = vld [vmem:[%s745 + $0x18] sm:$0xff]
        %v750 = vld [vmem:[%s745 + $0x20] sm:$0xff]
        %v751 = vld [vmem:[%s745 + $0x28] sm:$0xff]
        %v752 = vld [vmem:[%s745 + $0x30] sm:$0xff]
        %v753 = vld [vmem:[%s745 + $0x38] sm:$0xff]
        %v754 = vld [vmem:[%s745 + $0x40] sm:$0xff]
        %v755 = vld [vmem:[%s745 + $0x48] sm:$0xff]
        %v756 = vld [vmem:[%s745 + $0x50] sm:$0xff]
        %v757 = vld [vmem:[%s745 + $0x58] sm:$0xff]
        %vm758 = vcmask 1044480
        %v759 = vrot.slane %v438, 3
        %v760 = vrot.slane %v439, 3
        %v761 = vsel %vm758, %v759, %v760
        %v762 = vrot.slane %v440, 3
        %v763 = vsel %vm758, %v760, %v762
        %v764 = vrot.slane %v441, 3
        %v765 = vsel %vm758, %v762, %v764
        %v766 = vsel %vm491, %v761, 0
        %v768 = vsel %vm491, %v763, 0
        %v770 = vsel %vm491, %v765, 0
        %v772 = vsel %vm491, %v764, 0
        %774 = vmatpush.msra.mxu0 0.0
        %775 = vmatpush.msra.mxu0 0.0
        %776 = vmatpush.msra.mxu0 0.0
        %777 = vmatpush.msra.mxu0 0.0
        %778 = vmatpush.msra.mxu0 %v757
        %779 = vmatpush.msra.mxu0 %v756
        %780 = vmatpush.msra.mxu0 %v755
        %781 = vmatpush.msra.mxu0 %v754
        %782 = vmatpush.msra.mxu0 %v753
        %783 = vmatpush.msra.mxu0 %v752
        %784 = vmatpush.msra.mxu0 %v751
        %785 = vmatpush.msra.mxu0 %v750
        %786 = vmatpush.msra.mxu0 %v749
        %787 = vmatpush.msra.mxu0 %v748
        %788 = vmatpush.msra.mxu0 %v747
        %789 = vmatpush.msra.mxu0 %v746
        %790 = vmatmul.f32.gmra.mxu0 %v766
        %v791 = vpop.f32.mrf.mxu0
        %v792 = vadd.f32 0.0, %v791
        %793 = vmatmul.f32.gmra.mxu0 %v768
        %v794 = vpop.f32.mrf.mxu0
        %v795 = vadd.f32 0.0, %v794
        %796 = vmatmul.f32.gmra.mxu0 %v770
        %v797 = vpop.f32.mrf.mxu0
        %v798 = vadd.f32 0.0, %v797
        %799 = vmatmul.f32.gmra.mxu0 %v772
        %v800 = vpop.f32.mrf.mxu0
        %v801 = vadd.f32 0.0, %v800
        %802 = vdwg.mxu0
        %v803 = vadd.f32 %v695, %v792
        %v804 = vadd.f32 %v696, %v795
        %v805 = vadd.f32 %v697, %v798
        %v806 = vadd.f32 %v698, %v801
        %s807 = scalar_lea.vmem %s2, 288
        %v808 = vld [vmem:[%s807] sm:$0xff]
        %v809 = vld [vmem:[%s807 + $0x8] sm:$0xff]
        %v810 = vld [vmem:[%s807 + $0x10] sm:$0xff]
        %v811 = vld [vmem:[%s807 + $0x18] sm:$0xff]
        %v812 = vld [vmem:[%s807 + $0x20] sm:$0xff]
        %v813 = vld [vmem:[%s807 + $0x28] sm:$0xff]
        %v814 = vld [vmem:[%s807 + $0x30] sm:$0xff]
        %v815 = vld [vmem:[%s807 + $0x38] sm:$0xff]
        %v816 = vld [vmem:[%s807 + $0x40] sm:$0xff]
        %v817 = vld [vmem:[%s807 + $0x48] sm:$0xff]
        %v818 = vld [vmem:[%s807 + $0x50] sm:$0xff]
        %v819 = vld [vmem:[%s807 + $0x58] sm:$0xff]
        %820 = vmatpush.msra.mxu0 0.0
        %821 = vmatpush.msra.mxu0 0.0
        %822 = vmatpush.msra.mxu0 0.0
        %823 = vmatpush.msra.mxu0 0.0
        %824 = vmatpush.msra.mxu0 %v819
        %825 = vmatpush.msra.mxu0 %v818
        %826 = vmatpush.msra.mxu0 %v817
        %827 = vmatpush.msra.mxu0 %v816
        %828 = vmatpush.msra.mxu0 %v815
        %829 = vmatpush.msra.mxu0 %v814
        %830 = vmatpush.msra.mxu0 %v813
        %831 = vmatpush.msra.mxu0 %v812
        %832 = vmatpush.msra.mxu0 %v811
        %833 = vmatpush.msra.mxu0 %v810
        %834 = vmatpush.msra.mxu0 %v809
        %835 = vmatpush.msra.mxu0 %v808
        %836 = vmatmul.f32.gmra.mxu0 %v766
        %v837 = vpop.f32.mrf.mxu0
        %v838 = vadd.f32 0.0, %v837
        %839 = vmatmul.f32.gmra.mxu0 %v768
        %v840 = vpop.f32.mrf.mxu0
        %v841 = vadd.f32 0.0, %v840
        %842 = vmatmul.f32.gmra.mxu0 %v770
        %v843 = vpop.f32.mrf.mxu0
        %v844 = vadd.f32 0.0, %v843
        %845 = vmatmul.f32.gmra.mxu0 %v772
        %v846 = vpop.f32.mrf.mxu0
        %v847 = vadd.f32 0.0, %v846
        %848 = vdwg.mxu0
        %v849 = vadd.f32 %v741, %v838
        %v850 = vadd.f32 %v742, %v841
        %v851 = vadd.f32 %v743, %v844
        %v852 = vadd.f32 %v744, %v847
        %s853 = scalar_lea.vmem %s1, 384
        %v854 = vld [vmem:[%s853] sm:$0xff]
        %v855 = vld [vmem:[%s853 + $0x8] sm:$0xff]
        %v856 = vld [vmem:[%s853 + $0x10] sm:$0xff]
        %v857 = vld [vmem:[%s853 + $0x18] sm:$0xff]
        %v858 = vld [vmem:[%s853 + $0x20] sm:$0xff]
        %v859 = vld [vmem:[%s853 + $0x28] sm:$0xff]
        %v860 = vld [vmem:[%s853 + $0x30] sm:$0xff]
        %v861 = vld [vmem:[%s853 + $0x38] sm:$0xff]
        %v862 = vld [vmem:[%s853 + $0x40] sm:$0xff]
        %v863 = vld [vmem:[%s853 + $0x48] sm:$0xff]
        %v864 = vld [vmem:[%s853 + $0x50] sm:$0xff]
        %v865 = vld [vmem:[%s853 + $0x58] sm:$0xff]
        %vm866 = vcmask 1043456
        %v867 = vrot.slane %v438, 4
        %v868 = vrot.slane %v439, 4
        %v869 = vsel %vm866, %v867, %v868
        %v870 = vrot.slane %v440, 4
        %v871 = vsel %vm866, %v868, %v870
        %v872 = vrot.slane %v441, 4
        %v873 = vsel %vm866, %v870, %v872
        %v874 = vsel %vm491, %v869, 0
        %v876 = vsel %vm491, %v871, 0
        %v878 = vsel %vm491, %v873, 0
        %v880 = vsel %vm491, %v872, 0
        %882 = vmatpush.msra.mxu0 0.0
        %883 = vmatpush.msra.mxu0 0.0
        %884 = vmatpush.msra.mxu0 0.0
        %885 = vmatpush.msra.mxu0 0.0
        %886 = vmatpush.msra.mxu0 %v865
        %887 = vmatpush.msra.mxu0 %v864
        %888 = vmatpush.msra.mxu0 %v863
        %889 = vmatpush.msra.mxu0 %v862
        %890 = vmatpush.msra.mxu0 %v861
        %891 = vmatpush.msra.mxu0 %v860
        %892 = vmatpush.msra.mxu0 %v859
        %893 = vmatpush.msra.mxu0 %v858
        %894 = vmatpush.msra.mxu0 %v857
        %895 = vmatpush.msra.mxu0 %v856
        %896 = vmatpush.msra.mxu0 %v855
        %897 = vmatpush.msra.mxu0 %v854
        %898 = vmatmul.f32.gmra.mxu0 %v874
        %v899 = vpop.f32.mrf.mxu0
        %v900 = vadd.f32 0.0, %v899
        %901 = vmatmul.f32.gmra.mxu0 %v876
        %v902 = vpop.f32.mrf.mxu0
        %v903 = vadd.f32 0.0, %v902
        %904 = vmatmul.f32.gmra.mxu0 %v878
        %v905 = vpop.f32.mrf.mxu0
        %v906 = vadd.f32 0.0, %v905
        %907 = vmatmul.f32.gmra.mxu0 %v880
        %v908 = vpop.f32.mrf.mxu0
        %v909 = vadd.f32 0.0, %v908
        %910 = vdwg.mxu0
        %v911 = vadd.f32 %v803, %v900
        %v912 = vadd.f32 %v804, %v903
        %v913 = vadd.f32 %v805, %v906
        %v914 = vadd.f32 %v806, %v909
        %s915 = scalar_lea.vmem %s2, 384
        %v916 = vld [vmem:[%s915] sm:$0xff]
        %v917 = vld [vmem:[%s915 + $0x8] sm:$0xff]
        %v918 = vld [vmem:[%s915 + $0x10] sm:$0xff]
        %v919 = vld [vmem:[%s915 + $0x18] sm:$0xff]
        %v920 = vld [vmem:[%s915 + $0x20] sm:$0xff]
        %v921 = vld [vmem:[%s915 + $0x28] sm:$0xff]
        %v922 = vld [vmem:[%s915 + $0x30] sm:$0xff]
        %v923 = vld [vmem:[%s915 + $0x38] sm:$0xff]
        %v924 = vld [vmem:[%s915 + $0x40] sm:$0xff]
        %v925 = vld [vmem:[%s915 + $0x48] sm:$0xff]
        %v926 = vld [vmem:[%s915 + $0x50] sm:$0xff]
        %v927 = vld [vmem:[%s915 + $0x58] sm:$0xff]
        %928 = vmatpush.msra.mxu0 0.0
        %929 = vmatpush.msra.mxu0 0.0
        %930 = vmatpush.msra.mxu0 0.0
        %931 = vmatpush.msra.mxu0 0.0
        %932 = vmatpush.msra.mxu0 %v927
        %933 = vmatpush.msra.mxu0 %v926
        %934 = vmatpush.msra.mxu0 %v925
        %935 = vmatpush.msra.mxu0 %v924
        %936 = vmatpush.msra.mxu0 %v923
        %937 = vmatpush.msra.mxu0 %v922
        %938 = vmatpush.msra.mxu0 %v921
        %939 = vmatpush.msra.mxu0 %v920
        %940 = vmatpush.msra.mxu0 %v919
        %941 = vmatpush.msra.mxu0 %v918
        %942 = vmatpush.msra.mxu0 %v917
        %943 = vmatpush.msra.mxu0 %v916
        %944 = vmatmul.f32.gmra.mxu0 %v874
        %v945 = vpop.f32.mrf.mxu0
        %v946 = vadd.f32 0.0, %v945
        %947 = vmatmul.f32.gmra.mxu0 %v876
        %v948 = vpop.f32.mrf.mxu0
        %v949 = vadd.f32 0.0, %v948
        %950 = vmatmul.f32.gmra.mxu0 %v878
        %v951 = vpop.f32.mrf.mxu0
        %v952 = vadd.f32 0.0, %v951
        %953 = vmatmul.f32.gmra.mxu0 %v880
        %v954 = vpop.f32.mrf.mxu0
        %v955 = vadd.f32 0.0, %v954
        %956 = vdwg.mxu0
        %v957 = vadd.f32 %v849, %v946
        %v958 = vadd.f32 %v850, %v949
        %v959 = vadd.f32 %v851, %v952
        %v960 = vadd.f32 %v852, %v955
        %v961 = vld [vmem:[%s3] sm:$0x1]
        %v963 = vperm.slane %v961, 0
        %v965 = vadd.f32 %v911, %v963
        %v966 = vadd.f32 %v912, %v963
        %v967 = vadd.f32 %v913, %v963
        %v968 = vadd.f32 %v914, %v963
        %v969 = vmax.f32 %v965, 0.0
        %v970 = vmax.f32 %v966, 0.0
        %v971 = vmax.f32 %v967, 0.0
        %v972 = vmax.f32 %v968, 0.0
        %vm973 = vcmask 687104
        %974 = vst.msk [vmem:[#allocation2] sm:$0xff] %vm973, %v969
        %975 = vst.msk [vmem:[#allocation2 + $0x8] sm:$0xff] %vm973, %v970
        %976 = vst.msk [vmem:[#allocation2 + $0x10] sm:$0xff] %vm973, %v971
        %vm977 = vcmask 683008
        %978 = vst.msk [vmem:[#allocation2 + $0x18] sm:$0xf] %vm977, %v972
        %v979 = vld [vmem:[%s3] sm:$0x1]
        %v981 = vperm.slane %v979, 0
        %v983 = vadd.f32 %v957, %v981
        %v984 = vadd.f32 %v958, %v981
        %v985 = vadd.f32 %v959, %v981
        %v986 = vadd.f32 %v960, %v981
        %v987 = vmax.f32 %v983, 0.0
        %v988 = vmax.f32 %v984, 0.0
        %v989 = vmax.f32 %v985, 0.0
        %v990 = vmax.f32 %v986, 0.0
        %991 = vst.msk [vmem:[#allocation3] sm:$0xff] %vm973, %v987
        %992 = vst.msk [vmem:[#allocation3 + $0x8] sm:$0xff] %vm973, %v988
        %993 = vst.msk [vmem:[#allocation3 + $0x10] sm:$0xff] %vm973, %v989
        %994 = vst.msk [vmem:[#allocation3 + $0x18] sm:$0xf] %vm977, %v990
        %v995 = vld [vmem:[#allocation2] ss:$2 sm:$0xff]
        %s996 = scalar_lea.vmem [#allocation2], 16
        %v997 = vld [vmem:[%s996] ss:$2 sm:$0x3f]
        %s998 = scalar_lea.vmem [#allocation2], 1
        %v999 = vld [vmem:[%s998] ss:$2 sm:$0xff]
        %s1000 = scalar_lea.vmem [#allocation2], 17
        %v1001 = vld [vmem:[%s1000] ss:$2 sm:$0x3f]
        %v1002 = vmax.f32 %v995, %v999
        %v1003 = vmax.f32 %v997, %v1001
        %v1004 = vld [vmem:[#allocation3] ss:$2 sm:$0xff]
        %s1005 = scalar_lea.vmem [#allocation3], 16
        %v1006 = vld [vmem:[%s1005] ss:$2 sm:$0x3f]
        %s1007 = scalar_lea.vmem [#allocation3], 1
        %v1008 = vld [vmem:[%s1007] ss:$2 sm:$0xff]
        %s1009 = scalar_lea.vmem [#allocation3], 17
        %v1010 = vld [vmem:[%s1009] ss:$2 sm:$0x3f]
        %v1011 = vmax.f32 %v1004, %v1008
        %v1012 = vmax.f32 %v1006, %v1010
        %v1013 = vmax.f32 %v1002, %v1011
        %v1014 = vmax.f32 %v1003, %v1012
        %v1015 = vld [vmem:[%s4] sm:$0xff]
        %v1016 = vld [vmem:[%s4 + $0x8] sm:$0xff]
        %v1017 = vld [vmem:[%s4 + $0x10] sm:$0xff]
        %v1018 = vld [vmem:[%s4 + $0x18] sm:$0xff]
        %v1019 = vld [vmem:[%s4 + $0x20] sm:$0xff]
        %v1020 = vld [vmem:[%s4 + $0x28] sm:$0xff]
        %v1021 = vld [vmem:[%s4 + $0x30] sm:$0xff]
        %v1022 = vld [vmem:[%s4 + $0x38] sm:$0xff]
        %v1023 = vld [vmem:[%s4 + $0x40] sm:$0xff]
        %v1024 = vld [vmem:[%s4 + $0x48] sm:$0xff]
        %v1025 = vld [vmem:[%s4 + $0x50] sm:$0xf]
        %v1026 = vld [vmem:[%s5] sm:$0xff]
        %v1027 = vld [vmem:[%s5 + $0x8] sm:$0xff]
        %v1028 = vld [vmem:[%s5 + $0x10] sm:$0xff]
        %v1029 = vld [vmem:[%s5 + $0x18] sm:$0xff]
        %v1030 = vld [vmem:[%s5 + $0x20] sm:$0xff]
        %v1031 = vld [vmem:[%s5 + $0x28] sm:$0xff]
        %v1032 = vld [vmem:[%s5 + $0x30] sm:$0xff]
        %v1033 = vld [vmem:[%s5 + $0x38] sm:$0xff]
        %v1034 = vld [vmem:[%s5 + $0x40] sm:$0xff]
        %v1035 = vld [vmem:[%s5 + $0x48] sm:$0xff]
        %v1036 = vld [vmem:[%s5 + $0x50] sm:$0xf]
        %s1037 = scalar_lea.vmem %s4, 88
        %v1038 = vld [vmem:[%s1037] sm:$0xff]
        %v1039 = vld [vmem:[%s1037 + $0x8] sm:$0xff]
        %v1040 = vld [vmem:[%s1037 + $0x10] sm:$0xff]
        %v1041 = vld [vmem:[%s1037 + $0x18] sm:$0xff]
        %v1042 = vld [vmem:[%s1037 + $0x20] sm:$0xff]
        %v1043 = vld [vmem:[%s1037 + $0x28] sm:$0xff]
        %v1044 = vld [vmem:[%s1037 + $0x30] sm:$0xff]
        %v1045 = vld [vmem:[%s1037 + $0x38] sm:$0xff]
        %v1046 = vld [vmem:[%s1037 + $0x40] sm:$0xff]
        %v1047 = vld [vmem:[%s1037 + $0x48] sm:$0xff]
        %v1048 = vld [vmem:[%s1037 + $0x50] sm:$0xf]
        %v1051 = vrot.slane %v1013, 1
        %v1052 = vrot.slane %v1014, 1
        %v1053 = vsel %vm483, %v1051, %v1052
        %v1054 = vsel %vm973, %v1053, 0
        %v1056 = vsel %vm973, %v1052, 0
        %v1059 = vsel %vm866, %v1048, 0
        %1061 = vmatpush.msra.mxu0 0.0
        %1062 = vmatpush.msra.mxu0 0.0
        %1063 = vmatpush.msra.mxu0 0.0
        %1064 = vmatpush.msra.mxu0 0.0
        %1065 = vmatpush.msra.mxu0 0.0
        %1066 = vmatpush.msra.mxu0 %v1059
        %1067 = vmatpush.msra.mxu0 %v1047
        %1068 = vmatpush.msra.mxu0 %v1046
        %1069 = vmatpush.msra.mxu0 %v1045
        %1070 = vmatpush.msra.mxu0 %v1044
        %1071 = vmatpush.msra.mxu0 %v1043
        %1072 = vmatpush.msra.mxu0 %v1042
        %1073 = vmatpush.msra.mxu0 %v1041
        %1074 = vmatpush.msra.mxu0 %v1040
        %1075 = vmatpush.msra.mxu0 %v1039
        %1076 = vmatpush.msra.mxu0 %v1038
        %1077 = vmatmul.f32.gmra.mxu0 %v1054
        %v1078 = vpop.f32.mrf.mxu0
        %v1079 = vadd.f32 0.0, %v1078
        %1080 = vmatmul.f32.gmra.mxu0 %v1056
        %v1081 = vpop.f32.mrf.mxu0
        %v1082 = vadd.f32 0.0, %v1081
        %1083 = vdwg.mxu0
        %v1084 = vsel %vm973, %v1013, 0
        %v1086 = vsel %vm973, %v1014, 0
        %v1089 = vsel %vm866, %v1025, 0
        %1091 = vmatpush.msra.mxu0 0.0
        %1092 = vmatpush.msra.mxu0 0.0
        %1093 = vmatpush.msra.mxu0 0.0
        %1094 = vmatpush.msra.mxu0 0.0
        %1095 = vmatpush.msra.mxu0 0.0
        %1096 = vmatpush.msra.mxu0 %v1089
        %1097 = vmatpush.msra.mxu0 %v1024
        %1098 = vmatpush.msra.mxu0 %v1023
        %1099 = vmatpush.msra.mxu0 %v1022
        %1100 = vmatpush.msra.mxu0 %v1021
        %1101 = vmatpush.msra.mxu0 %v1020
        %1102 = vmatpush.msra.mxu0 %v1019
        %1103 = vmatpush.msra.mxu0 %v1018
        %1104 = vmatpush.msra.mxu0 %v1017
        %1105 = vmatpush.msra.mxu0 %v1016
        %1106 = vmatpush.msra.mxu0 %v1015
        %1107 = vmatmul.f32.gmra.mxu0 %v1084
        %v1108 = vpop.f32.mrf.mxu0
        %v1109 = vadd.f32 %v1079, %v1108
        %1110 = vmatmul.f32.gmra.mxu0 %v1086
        %v1111 = vpop.f32.mrf.mxu0
        %v1112 = vadd.f32 %v1082, %v1111
        %1113 = vdwg.mxu0
        %s1114 = scalar_lea.vmem %s5, 88
        %v1115 = vld [vmem:[%s1114] sm:$0xff]
        %v1116 = vld [vmem:[%s1114 + $0x8] sm:$0xff]
        %v1117 = vld [vmem:[%s1114 + $0x10] sm:$0xff]
        %v1118 = vld [vmem:[%s1114 + $0x18] sm:$0xff]
        %v1119 = vld [vmem:[%s1114 + $0x20] sm:$0xff]
        %v1120 = vld [vmem:[%s1114 + $0x28] sm:$0xff]
        %v1121 = vld [vmem:[%s1114 + $0x30] sm:$0xff]
        %v1122 = vld [vmem:[%s1114 + $0x38] sm:$0xff]
        %v1123 = vld [vmem:[%s1114 + $0x40] sm:$0xff]
        %v1124 = vld [vmem:[%s1114 + $0x48] sm:$0xff]
        %v1125 = vld [vmem:[%s1114 + $0x50] sm:$0xf]
        %v1127 = vsel %vm866, %v1125, 0
        %1129 = vmatpush.msra.mxu0 0.0
        %1130 = vmatpush.msra.mxu0 0.0
        %1131 = vmatpush.msra.mxu0 0.0
        %1132 = vmatpush.msra.mxu0 0.0
        %1133 = vmatpush.msra.mxu0 0.0
        %1134 = vmatpush.msra.mxu0 %v1127
        %1135 = vmatpush.msra.mxu0 %v1124
        %1136 = vmatpush.msra.mxu0 %v1123
        %1137 = vmatpush.msra.mxu0 %v1122
        %1138 = vmatpush.msra.mxu0 %v1121
        %1139 = vmatpush.msra.mxu0 %v1120
        %1140 = vmatpush.msra.mxu0 %v1119
        %1141 = vmatpush.msra.mxu0 %v1118
        %1142 = vmatpush.msra.mxu0 %v1117
        %1143 = vmatpush.msra.mxu0 %v1116
        %1144 = vmatpush.msra.mxu0 %v1115
        %1145 = vmatmul.f32.gmra.mxu0 %v1054
        %v1146 = vpop.f32.mrf.mxu0
        %v1147 = vadd.f32 0.0, %v1146
        %1148 = vmatmul.f32.gmra.mxu0 %v1056
        %v1149 = vpop.f32.mrf.mxu0
        %v1150 = vadd.f32 0.0, %v1149
        %1151 = vdwg.mxu0
        %v1153 = vsel %vm866, %v1036, 0
        %1155 = vmatpush.msra.mxu0 0.0
        %1156 = vmatpush.msra.mxu0 0.0
        %1157 = vmatpush.msra.mxu0 0.0
        %1158 = vmatpush.msra.mxu0 0.0
        %1159 = vmatpush.msra.mxu0 0.0
        %1160 = vmatpush.msra.mxu0 %v1153
        %1161 = vmatpush.msra.mxu0 %v1035
        %1162 = vmatpush.msra.mxu0 %v1034
        %1163 = vmatpush.msra.mxu0 %v1033
        %1164 = vmatpush.msra.mxu0 %v1032
        %1165 = vmatpush.msra.mxu0 %v1031
        %1166 = vmatpush.msra.mxu0 %v1030
        %1167 = vmatpush.msra.mxu0 %v1029
        %1168 = vmatpush.msra.mxu0 %v1028
        %1169 = vmatpush.msra.mxu0 %v1027
        %1170 = vmatpush.msra.mxu0 %v1026
        %1171 = vmatmul.f32.gmra.mxu0 %v1084
        %v1172 = vpop.f32.mrf.mxu0
        %v1173 = vadd.f32 %v1147, %v1172
        %1174 = vmatmul.f32.gmra.mxu0 %v1086
        %v1175 = vpop.f32.mrf.mxu0
        %v1176 = vadd.f32 %v1150, %v1175
        %1177 = vdwg.mxu0
        %s1178 = scalar_lea.vmem %s4, 176
        %v1179 = vld [vmem:[%s1178] sm:$0xff]
        %v1180 = vld [vmem:[%s1178 + $0x8] sm:$0xff]
        %v1181 = vld [vmem:[%s1178 + $0x10] sm:$0xff]
        %v1182 = vld [vmem:[%s1178 + $0x18] sm:$0xff]
        %v1183 = vld [vmem:[%s1178 + $0x20] sm:$0xff]
        %v1184 = vld [vmem:[%s1178 + $0x28] sm:$0xff]
        %v1185 = vld [vmem:[%s1178 + $0x30] sm:$0xff]
        %v1186 = vld [vmem:[%s1178 + $0x38] sm:$0xff]
        %v1187 = vld [vmem:[%s1178 + $0x40] sm:$0xff]
        %v1188 = vld [vmem:[%s1178 + $0x48] sm:$0xff]
        %v1189 = vld [vmem:[%s1178 + $0x50] sm:$0xf]
        %v1190 = vrot.slane %v1013, 2
        %v1191 = vrot.slane %v1014, 2
        %v1192 = vsel %vm650, %v1190, %v1191
        %v1193 = vsel %vm973, %v1192, 0
        %v1195 = vsel %vm973, %v1191, 0
        %v1198 = vsel %vm866, %v1189, 0
        %1200 = vmatpush.msra.mxu0 0.0
        %1201 = vmatpush.msra.mxu0 0.0
        %1202 = vmatpush.msra.mxu0 0.0
        %1203 = vmatpush.msra.mxu0 0.0
        %1204 = vmatpush.msra.mxu0 0.0
        %1205 = vmatpush.msra.mxu0 %v1198
        %1206 = vmatpush.msra.mxu0 %v1188
        %1207 = vmatpush.msra.mxu0 %v1187
        %1208 = vmatpush.msra.mxu0 %v1186
        %1209 = vmatpush.msra.mxu0 %v1185
        %1210 = vmatpush.msra.mxu0 %v1184
        %1211 = vmatpush.msra.mxu0 %v1183
        %1212 = vmatpush.msra.mxu0 %v1182
        %1213 = vmatpush.msra.mxu0 %v1181
        %1214 = vmatpush.msra.mxu0 %v1180
        %1215 = vmatpush.msra.mxu0 %v1179
        %1216 = vmatmul.f32.gmra.mxu0 %v1193
        %v1217 = vpop.f32.mrf.mxu0
        %v1218 = vadd.f32 0.0, %v1217
        %1219 = vmatmul.f32.gmra.mxu0 %v1195
        %v1220 = vpop.f32.mrf.mxu0
        %v1221 = vadd.f32 0.0, %v1220
        %1222 = vdwg.mxu0
        %v1223 = vadd.f32 %v1109, %v1218
        %v1224 = vadd.f32 %v1112, %v1221
        %s1225 = scalar_lea.vmem %s5, 176
        %v1226 = vld [vmem:[%s1225] sm:$0xff]
        %v1227 = vld [vmem:[%s1225 + $0x8] sm:$0xff]
        %v1228 = vld [vmem:[%s1225 + $0x10] sm:$0xff]
        %v1229 = vld [vmem:[%s1225 + $0x18] sm:$0xff]
        %v1230 = vld [vmem:[%s1225 + $0x20] sm:$0xff]
        %v1231 = vld [vmem:[%s1225 + $0x28] sm:$0xff]
        %v1232 = vld [vmem:[%s1225 + $0x30] sm:$0xff]
        %v1233 = vld [vmem:[%s1225 + $0x38] sm:$0xff]
        %v1234 = vld [vmem:[%s1225 + $0x40] sm:$0xff]
        %v1235 = vld [vmem:[%s1225 + $0x48] sm:$0xff]
        %v1236 = vld [vmem:[%s1225 + $0x50] sm:$0xf]
        %v1238 = vsel %vm866, %v1236, 0
        %1240 = vmatpush.msra.mxu0 0.0
        %1241 = vmatpush.msra.mxu0 0.0
        %1242 = vmatpush.msra.mxu0 0.0
        %1243 = vmatpush.msra.mxu0 0.0
        %1244 = vmatpush.msra.mxu0 0.0
        %1245 = vmatpush.msra.mxu0 %v1238
        %1246 = vmatpush.msra.mxu0 %v1235
        %1247 = vmatpush.msra.mxu0 %v1234
        %1248 = vmatpush.msra.mxu0 %v1233
        %1249 = vmatpush.msra.mxu0 %v1232
        %1250 = vmatpush.msra.mxu0 %v1231
        %1251 = vmatpush.msra.mxu0 %v1230
        %1252 = vmatpush.msra.mxu0 %v1229
        %1253 = vmatpush.msra.mxu0 %v1228
        %1254 = vmatpush.msra.mxu0 %v1227
        %1255 = vmatpush.msra.mxu0 %v1226
        %1256 = vmatmul.f32.gmra.mxu0 %v1193
        %v1257 = vpop.f32.mrf.mxu0
        %v1258 = vadd.f32 0.0, %v1257
        %1259 = vmatmul.f32.gmra.mxu0 %v1195
        %v1260 = vpop.f32.mrf.mxu0
        %v1261 = vadd.f32 0.0, %v1260
        %1262 = vdwg.mxu0
        %v1263 = vadd.f32 %v1173, %v1258
        %v1264 = vadd.f32 %v1176, %v1261
        %s1265 = scalar_lea.vmem %s4, 264
        %v1266 = vld [vmem:[%s1265] sm:$0xff]
        %v1267 = vld [vmem:[%s1265 + $0x8] sm:$0xff]
        %v1268 = vld [vmem:[%s1265 + $0x10] sm:$0xff]
        %v1269 = vld [vmem:[%s1265 + $0x18] sm:$0xff]
        %v1270 = vld [vmem:[%s1265 + $0x20] sm:$0xff]
        %v1271 = vld [vmem:[%s1265 + $0x28] sm:$0xff]
        %v1272 = vld [vmem:[%s1265 + $0x30] sm:$0xff]
        %v1273 = vld [vmem:[%s1265 + $0x38] sm:$0xff]
        %v1274 = vld [vmem:[%s1265 + $0x40] sm:$0xff]
        %v1275 = vld [vmem:[%s1265 + $0x48] sm:$0xff]
        %v1276 = vld [vmem:[%s1265 + $0x50] sm:$0xf]
        %v1277 = vrot.slane %v1013, 3
        %v1278 = vrot.slane %v1014, 3
        %v1279 = vsel %vm758, %v1277, %v1278
        %v1280 = vsel %vm973, %v1279, 0
        %v1282 = vsel %vm973, %v1278, 0
        %v1285 = vsel %vm866, %v1276, 0
        %1287 = vmatpush.msra.mxu0 0.0
        %1288 = vmatpush.msra.mxu0 0.0
        %1289 = vmatpush.msra.mxu0 0.0
        %1290 = vmatpush.msra.mxu0 0.0
        %1291 = vmatpush.msra.mxu0 0.0
        %1292 = vmatpush.msra.mxu0 %v1285
        %1293 = vmatpush.msra.mxu0 %v1275
        %1294 = vmatpush.msra.mxu0 %v1274
        %1295 = vmatpush.msra.mxu0 %v1273
        %1296 = vmatpush.msra.mxu0 %v1272
        %1297 = vmatpush.msra.mxu0 %v1271
        %1298 = vmatpush.msra.mxu0 %v1270
        %1299 = vmatpush.msra.mxu0 %v1269
        %1300 = vmatpush.msra.mxu0 %v1268
        %1301 = vmatpush.msra.mxu0 %v1267
        %1302 = vmatpush.msra.mxu0 %v1266
        %1303 = vmatmul.f32.gmra.mxu0 %v1280
        %v1304 = vpop.f32.mrf.mxu0
        %v1305 = vadd.f32 0.0, %v1304
        %1306 = vmatmul.f32.gmra.mxu0 %v1282
        %v1307 = vpop.f32.mrf.mxu0
        %v1308 = vadd.f32 0.0, %v1307
        %1309 = vdwg.mxu0
        %v1310 = vadd.f32 %v1223, %v1305
        %v1311 = vadd.f32 %v1224, %v1308
        %s1312 = scalar_lea.vmem %s5, 264
        %v1313 = vld [vmem:[%s1312] sm:$0xff]
        %v1314 = vld [vmem:[%s1312 + $0x8] sm:$0xff]
        %v1315 = vld [vmem:[%s1312 + $0x10] sm:$0xff]
        %v1316 = vld [vmem:[%s1312 + $0x18] sm:$0xff]
        %v1317 = vld [vmem:[%s1312 + $0x20] sm:$0xff]
        %v1318 = vld [vmem:[%s1312 + $0x28] sm:$0xff]
        %v1319 = vld [vmem:[%s1312 + $0x30] sm:$0xff]
        %v1320 = vld [vmem:[%s1312 + $0x38] sm:$0xff]
        %v1321 = vld [vmem:[%s1312 + $0x40] sm:$0xff]
        %v1322 = vld [vmem:[%s1312 + $0x48] sm:$0xff]
        %v1323 = vld [vmem:[%s1312 + $0x50] sm:$0xf]
        %v1325 = vsel %vm866, %v1323, 0
        %1327 = vmatpush.msra.mxu0 0.0
        %1328 = vmatpush.msra.mxu0 0.0
        %1329 = vmatpush.msra.mxu0 0.0
        %1330 = vmatpush.msra.mxu0 0.0
        %1331 = vmatpush.msra.mxu0 0.0
        %1332 = vmatpush.msra.mxu0 %v1325
        %1333 = vmatpush.msra.mxu0 %v1322
        %1334 = vmatpush.msra.mxu0 %v1321
        %1335 = vmatpush.msra.mxu0 %v1320
        %1336 = vmatpush.msra.mxu0 %v1319
        %1337 = vmatpush.msra.mxu0 %v1318
        %1338 = vmatpush.msra.mxu0 %v1317
        %1339 = vmatpush.msra.mxu0 %v1316
        %1340 = vmatpush.msra.mxu0 %v1315
        %1341 = vmatpush.msra.mxu0 %v1314
        %1342 = vmatpush.msra.mxu0 %v1313
        %1343 = vmatmul.f32.gmra.mxu0 %v1280
        %v1344 = vpop.f32.mrf.mxu0
        %v1345 = vadd.f32 0.0, %v1344
        %1346 = vmatmul.f32.gmra.mxu0 %v1282
        %v1347 = vpop.f32.mrf.mxu0
        %v1348 = vadd.f32 0.0, %v1347
        %1349 = vdwg.mxu0
        %v1350 = vadd.f32 %v1263, %v1345
        %v1351 = vadd.f32 %v1264, %v1348
        %s1352 = scalar_lea.vmem %s4, 352
        %v1353 = vld [vmem:[%s1352] sm:$0xff]
        %v1354 = vld [vmem:[%s1352 + $0x8] sm:$0xff]
        %v1355 = vld [vmem:[%s1352 + $0x10] sm:$0xff]
        %v1356 = vld [vmem:[%s1352 + $0x18] sm:$0xff]
        %v1357 = vld [vmem:[%s1352 + $0x20] sm:$0xff]
        %v1358 = vld [vmem:[%s1352 + $0x28] sm:$0xff]
        %v1359 = vld [vmem:[%s1352 + $0x30] sm:$0xff]
        %v1360 = vld [vmem:[%s1352 + $0x38] sm:$0xff]
        %v1361 = vld [vmem:[%s1352 + $0x40] sm:$0xff]
        %v1362 = vld [vmem:[%s1352 + $0x48] sm:$0xff]
        %v1363 = vld [vmem:[%s1352 + $0x50] sm:$0xf]
        %v1364 = vrot.slane %v1013, 4
        %v1365 = vrot.slane %v1014, 4
        %v1366 = vsel %vm866, %v1364, %v1365
        %v1367 = vsel %vm973, %v1366, 0
        %v1369 = vsel %vm973, %v1365, 0
        %v1372 = vsel %vm866, %v1363, 0
        %1374 = vmatpush.msra.mxu0 0.0
        %1375 = vmatpush.msra.mxu0 0.0
        %1376 = vmatpush.msra.mxu0 0.0
        %1377 = vmatpush.msra.mxu0 0.0
        %1378 = vmatpush.msra.mxu0 0.0
        %1379 = vmatpush.msra.mxu0 %v1372
        %1380 = vmatpush.msra.mxu0 %v1362
        %1381 = vmatpush.msra.mxu0 %v1361
        %1382 = vmatpush.msra.mxu0 %v1360
        %1383 = vmatpush.msra.mxu0 %v1359
        %1384 = vmatpush.msra.mxu0 %v1358
        %1385 = vmatpush.msra.mxu0 %v1357
        %1386 = vmatpush.msra.mxu0 %v1356
        %1387 = vmatpush.msra.mxu0 %v1355
        %1388 = vmatpush.msra.mxu0 %v1354
        %1389 = vmatpush.msra.mxu0 %v1353
        %1390 = vmatmul.f32.gmra.mxu0 %v1367
        %v1391 = vpop.f32.mrf.mxu0
        %v1392 = vadd.f32 0.0, %v1391
        %1393 = vmatmul.f32.gmra.mxu0 %v1369
        %v1394 = vpop.f32.mrf.mxu0
        %v1395 = vadd.f32 0.0, %v1394
        %1396 = vdwg.mxu0
        %v1397 = vadd.f32 %v1310, %v1392
        %v1398 = vadd.f32 %v1311, %v1395
        %s1399 = scalar_lea.vmem %s5, 352
        %v1400 = vld [vmem:[%s1399] sm:$0xff]
        %v1401 = vld [vmem:[%s1399 + $0x8] sm:$0xff]
        %v1402 = vld [vmem:[%s1399 + $0x10] sm:$0xff]
        %v1403 = vld [vmem:[%s1399 + $0x18] sm:$0xff]
        %v1404 = vld [vmem:[%s1399 + $0x20] sm:$0xff]
        %v1405 = vld [vmem:[%s1399 + $0x28] sm:$0xff]
        %v1406 = vld [vmem:[%s1399 + $0x30] sm:$0xff]
        %v1407 = vld [vmem:[%s1399 + $0x38] sm:$0xff]
        %v1408 = vld [vmem:[%s1399 + $0x40] sm:$0xff]
        %v1409 = vld [vmem:[%s1399 + $0x48] sm:$0xff]
        %v1410 = vld [vmem:[%s1399 + $0x50] sm:$0xf]
        %v1412 = vsel %vm866, %v1410, 0
        %1414 = vmatpush.msra.mxu0 0.0
        %1415 = vmatpush.msra.mxu0 0.0
        %1416 = vmatpush.msra.mxu0 0.0
        %1417 = vmatpush.msra.mxu0 0.0
        %1418 = vmatpush.msra.mxu0 0.0
        %1419 = vmatpush.msra.mxu0 %v1412
        %1420 = vmatpush.msra.mxu0 %v1409
        %1421 = vmatpush.msra.mxu0 %v1408
        %1422 = vmatpush.msra.mxu0 %v1407
        %1423 = vmatpush.msra.mxu0 %v1406
        %1424 = vmatpush.msra.mxu0 %v1405
        %1425 = vmatpush.msra.mxu0 %v1404
        %1426 = vmatpush.msra.mxu0 %v1403
        %1427 = vmatpush.msra.mxu0 %v1402
        %1428 = vmatpush.msra.mxu0 %v1401
        %1429 = vmatpush.msra.mxu0 %v1400
        %1430 = vmatmul.f32.gmra.mxu0 %v1367
        %v1431 = vpop.f32.mrf.mxu0
        %v1432 = vadd.f32 0.0, %v1431
        %1433 = vmatmul.f32.gmra.mxu0 %v1369
        %v1434 = vpop.f32.mrf.mxu0
        %v1435 = vadd.f32 0.0, %v1434
        %1436 = vdwg.mxu0
        %v1437 = vadd.f32 %v1350, %v1432
        %v1438 = vadd.f32 %v1351, %v1435
        %v1439 = vld [vmem:[%s6] sm:$0x1]
        %v1441 = vperm.slane %v1439, 0
        %v1443 = vadd.f32 %v1397, %v1441
        %v1444 = vadd.f32 %v1398, %v1441
        %v1445 = vmax.f32 %v1443, 0.0
        %v1446 = vmax.f32 %v1444, 0.0
        %vm1447 = vcmask 654336
        %1448 = vst.msk [vmem:[#allocation4] sm:$0xff] %vm1447, %v1445
        %vm1449 = vcmask 648192
        %1450 = vst.msk [vmem:[#allocation4 + $0x8] sm:$0x3] %vm1449, %v1446
        %v1451 = vld [vmem:[%s6] sm:$0x1]
        %v1453 = vperm.slane %v1451, 0
        %v1455 = vadd.f32 %v1437, %v1453
        %v1456 = vadd.f32 %v1438, %v1453
        %v1457 = vmax.f32 %v1455, 0.0
        %v1458 = vmax.f32 %v1456, 0.0
        %1459 = vst.msk [vmem:[#allocation5] sm:$0xff] %vm1447, %v1457
        %1460 = vst.msk [vmem:[#allocation5 + $0x8] sm:$0x3] %vm1449, %v1458
        %v1461 = vld [vmem:[#allocation4] ss:$2 sm:$0x1f]
        %s1462 = scalar_lea.vmem [#allocation4], 1
        %v1463 = vld [vmem:[%s1462] ss:$2 sm:$0x1f]
        %v1464 = vmax.f32 %v1461, %v1463
        %v1465 = vld [vmem:[#allocation5] ss:$2 sm:$0x1f]
        %s1466 = scalar_lea.vmem [#allocation5], 1
        %v1467 = vld [vmem:[%s1466] ss:$2 sm:$0x1f]
        %v1468 = vmax.f32 %v1465, %v1467
        %v1469 = vmax.f32 %v1464, %v1468
        %v1470 = vld [vmem:[%s8] sm:$0x1]
        %v1471 = vld [vmem:[%s7] sm:$0xff]
        %v1472 = vld [vmem:[%s7 + $0x8] sm:$0xff]
        %v1473 = vld [vmem:[%s7 + $0x10] sm:$0xff]
        %v1474 = vld [vmem:[%s7 + $0x18] sm:$0xff]
        %v1475 = vld [vmem:[%s7 + $0x20] sm:$0xff]
        %v1476 = vld [vmem:[%s7 + $0x28] sm:$0xff]
        %v1477 = vld [vmem:[%s7 + $0x30] sm:$0xff]
        %v1478 = vld [vmem:[%s7 + $0x38] sm:$0xff]
        %v1479 = vld [vmem:[%s7 + $0x40] sm:$0xff]
        %v1480 = vld [vmem:[%s7 + $0x48] sm:$0xff]
        %v1482 = vsel %vm1447, %v1469, 0
        %1484 = vmatpush.msra.mxu0 0.0
        %1485 = vmatpush.msra.mxu0 0.0
        %1486 = vmatpush.msra.mxu0 0.0
        %1487 = vmatpush.msra.mxu0 0.0
        %1488 = vmatpush.msra.mxu0 0.0
        %1489 = vmatpush.msra.mxu0 0.0
        %1490 = vmatpush.msra.mxu0 %v1480
        %1491 = vmatpush.msra.mxu0 %v1479
        %1492 = vmatpush.msra.mxu0 %v1478
        %1493 = vmatpush.msra.mxu0 %v1477
        %1494 = vmatpush.msra.mxu0 %v1476
        %1495 = vmatpush.msra.mxu0 %v1475
        %1496 = vmatpush.msra.mxu0 %v1474
        %1497 = vmatpush.msra.mxu0 %v1473
        %1498 = vmatpush.msra.mxu0 %v1472
        %1499 = vmatpush.msra.mxu0 %v1471
        %1500 = vmatmul.f32.gmra.mxu0 %v1482
        %v1501 = vpop.f32.mrf.mxu0
        %v1502 = vadd.f32 0.0, %v1501
        %1503 = vdwg.mxu0
        %v1504 = vadd.f32 %v1470, %v1502
        %s1505 = scalar_lea.vmem %s7, 80
        %v1506 = vld [vmem:[%s1505] sm:$0xff]
        %v1507 = vld [vmem:[%s1505 + $0x8] sm:$0xff]
        %v1508 = vld [vmem:[%s1505 + $0x10] sm:$0xff]
        %v1509 = vld [vmem:[%s1505 + $0x18] sm:$0xff]
        %v1510 = vld [vmem:[%s1505 + $0x20] sm:$0xff]
        %v1511 = vld [vmem:[%s1505 + $0x28] sm:$0xff]
        %v1512 = vld [vmem:[%s1505 + $0x30] sm:$0xff]
        %v1513 = vld [vmem:[%s1505 + $0x38] sm:$0xff]
        %v1514 = vld [vmem:[%s1505 + $0x40] sm:$0xff]
        %v1515 = vld [vmem:[%s1505 + $0x48] sm:$0xff]
        %v1516 = vrot.slane %v1469, 1
        %v1517 = vsel %vm1447, %v1516, 0
        %1519 = vmatpush.msra.mxu0 0.0
        %1520 = vmatpush.msra.mxu0 0.0
        %1521 = vmatpush.msra.mxu0 0.0
        %1522 = vmatpush.msra.mxu0 0.0
        %1523 = vmatpush.msra.mxu0 0.0
        %1524 = vmatpush.msra.mxu0 0.0
        %1525 = vmatpush.msra.mxu0 %v1515
        %1526 = vmatpush.msra.mxu0 %v1514
        %1527 = vmatpush.msra.mxu0 %v1513
        %1528 = vmatpush.msra.mxu0 %v1512
        %1529 = vmatpush.msra.mxu0 %v1511
        %1530 = vmatpush.msra.mxu0 %v1510
        %1531 = vmatpush.msra.mxu0 %v1509
        %1532 = vmatpush.msra.mxu0 %v1508
        %1533 = vmatpush.msra.mxu0 %v1507
        %1534 = vmatpush.msra.mxu0 %v1506
        %1535 = vmatmul.f32.gmra.mxu0 %v1517
        %v1536 = vpop.f32.mrf.mxu0
        %v1537 = vadd.f32 0.0, %v1536
        %1538 = vdwg.mxu0
        %v1539 = vadd.f32 %v1504, %v1537
        %s1540 = scalar_lea.vmem %s7, 160
        %v1541 = vld [vmem:[%s1540] sm:$0xff]
        %v1542 = vld [vmem:[%s1540 + $0x8] sm:$0xff]
        %v1543 = vld [vmem:[%s1540 + $0x10] sm:$0xff]
        %v1544 = vld [vmem:[%s1540 + $0x18] sm:$0xff]
        %v1545 = vld [vmem:[%s1540 + $0x20] sm:$0xff]
        %v1546 = vld [vmem:[%s1540 + $0x28] sm:$0xff]
        %v1547 = vld [vmem:[%s1540 + $0x30] sm:$0xff]
        %v1548 = vld [vmem:[%s1540 + $0x38] sm:$0xff]
        %v1549 = vld [vmem:[%s1540 + $0x40] sm:$0xff]
        %v1550 = vld [vmem:[%s1540 + $0x48] sm:$0xff]
        %v1551 = vrot.slane %v1469, 2
        %v1552 = vsel %vm1447, %v1551, 0
        %1554 = vmatpush.msra.mxu0 0.0
        %1555 = vmatpush.msra.mxu0 0.0
        %1556 = vmatpush.msra.mxu0 0.0
        %1557 = vmatpush.msra.mxu0 0.0
        %1558 = vmatpush.msra.mxu0 0.0
        %1559 = vmatpush.msra.mxu0 0.0
        %1560 = vmatpush.msra.mxu0 %v1550
        %1561 = vmatpush.msra.mxu0 %v1549
        %1562 = vmatpush.msra.mxu0 %v1548
        %1563 = vmatpush.msra.mxu0 %v1547
        %1564 = vmatpush.msra.mxu0 %v1546
        %1565 = vmatpush.msra.mxu0 %v1545
        %1566 = vmatpush.msra.mxu0 %v1544
        %1567 = vmatpush.msra.mxu0 %v1543
        %1568 = vmatpush.msra.mxu0 %v1542
        %1569 = vmatpush.msra.mxu0 %v1541
        %1570 = vmatmul.f32.gmra.mxu0 %v1552
        %v1571 = vpop.f32.mrf.mxu0
        %v1572 = vadd.f32 0.0, %v1571
        %1573 = vdwg.mxu0
        %v1574 = vadd.f32 %v1539, %v1572
        %s1575 = scalar_lea.vmem %s7, 240
        %v1576 = vld [vmem:[%s1575] sm:$0xff]
        %v1577 = vld [vmem:[%s1575 + $0x8] sm:$0xff]
        %v1578 = vld [vmem:[%s1575 + $0x10] sm:$0xff]
        %v1579 = vld [vmem:[%s1575 + $0x18] sm:$0xff]
        %v1580 = vld [vmem:[%s1575 + $0x20] sm:$0xff]
        %v1581 = vld [vmem:[%s1575 + $0x28] sm:$0xff]
        %v1582 = vld [vmem:[%s1575 + $0x30] sm:$0xff]
        %v1583 = vld [vmem:[%s1575 + $0x38] sm:$0xff]
        %v1584 = vld [vmem:[%s1575 + $0x40] sm:$0xff]
        %v1585 = vld [vmem:[%s1575 + $0x48] sm:$0xff]
        %v1586 = vrot.slane %v1469, 3
        %v1587 = vsel %vm1447, %v1586, 0
        %1589 = vmatpush.msra.mxu0 0.0
        %1590 = vmatpush.msra.mxu0 0.0
        %1591 = vmatpush.msra.mxu0 0.0
        %1592 = vmatpush.msra.mxu0 0.0
        %1593 = vmatpush.msra.mxu0 0.0
        %1594 = vmatpush.msra.mxu0 0.0
        %1595 = vmatpush.msra.mxu0 %v1585
        %1596 = vmatpush.msra.mxu0 %v1584
        %1597 = vmatpush.msra.mxu0 %v1583
        %1598 = vmatpush.msra.mxu0 %v1582
        %1599 = vmatpush.msra.mxu0 %v1581
        %1600 = vmatpush.msra.mxu0 %v1580
        %1601 = vmatpush.msra.mxu0 %v1579
        %1602 = vmatpush.msra.mxu0 %v1578
        %1603 = vmatpush.msra.mxu0 %v1577
        %1604 = vmatpush.msra.mxu0 %v1576
        %1605 = vmatmul.f32.gmra.mxu0 %v1587
        %v1606 = vpop.f32.mrf.mxu0
        %v1607 = vadd.f32 0.0, %v1606
        %1608 = vdwg.mxu0
        %v1609 = vadd.f32 %v1574, %v1607
        %s1610 = scalar_lea.vmem %s7, 320
        %v1611 = vld [vmem:[%s1610] sm:$0xff]
        %v1612 = vld [vmem:[%s1610 + $0x8] sm:$0xff]
        %v1613 = vld [vmem:[%s1610 + $0x10] sm:$0xff]
        %v1614 = vld [vmem:[%s1610 + $0x18] sm:$0xff]
        %v1615 = vld [vmem:[%s1610 + $0x20] sm:$0xff]
        %v1616 = vld [vmem:[%s1610 + $0x28] sm:$0xff]
        %v1617 = vld [vmem:[%s1610 + $0x30] sm:$0xff]
        %v1618 = vld [vmem:[%s1610 + $0x38] sm:$0xff]
        %v1619 = vld [vmem:[%s1610 + $0x40] sm:$0xff]
        %v1620 = vld [vmem:[%s1610 + $0x48] sm:$0xff]
        %v1621 = vrot.slane %v1469, 4
        %v1622 = vsel %vm1447, %v1621, 0
        %1624 = vmatpush.msra.mxu0 0.0
        %1625 = vmatpush.msra.mxu0 0.0
        %1626 = vmatpush.msra.mxu0 0.0
        %1627 = vmatpush.msra.mxu0 0.0
        %1628 = vmatpush.msra.mxu0 0.0
        %1629 = vmatpush.msra.mxu0 0.0
        %1630 = vmatpush.msra.mxu0 %v1620
        %1631 = vmatpush.msra.mxu0 %v1619
        %1632 = vmatpush.msra.mxu0 %v1618
        %1633 = vmatpush.msra.mxu0 %v1617
        %1634 = vmatpush.msra.mxu0 %v1616
        %1635 = vmatpush.msra.mxu0 %v1615
        %1636 = vmatpush.msra.mxu0 %v1614
        %1637 = vmatpush.msra.mxu0 %v1613
        %1638 = vmatpush.msra.mxu0 %v1612
        %1639 = vmatpush.msra.mxu0 %v1611
        %1640 = vmatmul.f32.gmra.mxu0 %v1622
        %v1641 = vpop.f32.mrf.mxu0
        %v1642 = vadd.f32 0.0, %v1641
        %1643 = vdwg.mxu0
        %v1644 = vadd.f32 %v1609, %v1642
        %v1645 = vmax.f32 %v1644, 0.0
        %v1646 = vld [vmem:[%s9] sm:$0xff]
        %v1647 = vld [vmem:[%s9 + $0x8] sm:$0xff]
        %v1648 = vld [vmem:[%s9 + $0x10] sm:$0xff]
        %v1649 = vld [vmem:[%s9 + $0x18] sm:$0xff]
        %v1650 = vld [vmem:[%s9 + $0x20] sm:$0xff]
        %v1651 = vld [vmem:[%s9 + $0x28] sm:$0xff]
        %v1652 = vld [vmem:[%s9 + $0x30] sm:$0xff]
        %v1653 = vld [vmem:[%s9 + $0x38] sm:$0xff]
        %v1654 = vld [vmem:[%s9 + $0x40] sm:$0xff]
        %v1655 = vld [vmem:[%s9 + $0x48] sm:$0xff]
        %v1656 = vld [vmem:[%s9 + $0x50] sm:$0xff]
        %v1657 = vld [vmem:[%s9 + $0x58] sm:$0xff]
        %v1658 = vld [vmem:[%s9 + $0x60] sm:$0xff]
        %v1659 = vld [vmem:[%s9 + $0x68] sm:$0xff]
        %v1660 = vld [vmem:[%s9 + $0x70] sm:$0xff]
        %v1661 = vld [vmem:[%s9 + $0x78] sm:$0xff]
        %v1662 = vld [vmem:[%s10] sm:$0x1]
        %1663 = vmatpush.msra.mxu0 %v1661
        %1664 = vmatpush.msra.mxu0 %v1660
        %1665 = vmatpush.msra.mxu0 %v1659
        %1666 = vmatpush.msra.mxu0 %v1658
        %1667 = vmatpush.msra.mxu0 %v1657
        %1668 = vmatpush.msra.mxu0 %v1656
        %1669 = vmatpush.msra.mxu0 %v1655
        %1670 = vmatpush.msra.mxu0 %v1654
        %1671 = vmatpush.msra.mxu0 %v1653
        %1672 = vmatpush.msra.mxu0 %v1652
        %1673 = vmatpush.msra.mxu0 %v1651
        %1674 = vmatpush.msra.mxu0 %v1650
        %1675 = vmatpush.msra.mxu0 %v1649
        %1676 = vmatpush.msra.mxu0 %v1648
        %1677 = vmatpush.msra.mxu0 %v1647
        %1678 = vmatpush.msra.mxu0 %v1646
        %1679 = vmatmul.f32.gmra.mxu0 %v1645
        %v1680 = vpop.f32.mrf.mxu0
        %v1681 = vadd.f32 %v1662, %v1680
        %1682 = vdwg.mxu0
        %v1683 = vmax.f32 %v1681, 0.0
        %v1684 = vld [vmem:[%s11] sm:$0xff]
        %v1685 = vld [vmem:[%s11 + $0x8] sm:$0xff]
        %v1686 = vld [vmem:[%s11 + $0x10] sm:$0xff]
        %v1687 = vld [vmem:[%s11 + $0x18] sm:$0xff]
        %v1688 = vld [vmem:[%s11 + $0x20] sm:$0xff]
        %v1689 = vld [vmem:[%s11 + $0x28] sm:$0xff]
        %v1690 = vld [vmem:[%s11 + $0x30] sm:$0xff]
        %v1691 = vld [vmem:[%s11 + $0x38] sm:$0xff]
        %v1692 = vld [vmem:[%s11 + $0x40] sm:$0xff]
        %v1693 = vld [vmem:[%s11 + $0x48] sm:$0xff]
        %v1694 = vld [vmem:[%s11 + $0x50] sm:$0xff]
        %v1695 = vld [vmem:[%s11 + $0x58] sm:$0xff]
        %v1696 = vld [vmem:[%s11 + $0x60] sm:$0xff]
        %v1697 = vld [vmem:[%s11 + $0x68] sm:$0xff]
        %v1698 = vld [vmem:[%s11 + $0x70] sm:$0xff]
        %v1699 = vld [vmem:[%s11 + $0x78] sm:$0xff]
        %v1700 = vld [vmem:[%s12] sm:$0x1]
        %1701 = vmatpush.msra.mxu0 %v1699
        %1702 = vmatpush.msra.mxu0 %v1698
        %1703 = vmatpush.msra.mxu0 %v1697
        %1704 = vmatpush.msra.mxu0 %v1696
        %1705 = vmatpush.msra.mxu0 %v1695
        %1706 = vmatpush.msra.mxu0 %v1694
        %1707 = vmatpush.msra.mxu0 %v1693
        %1708 = vmatpush.msra.mxu0 %v1692
        %1709 = vmatpush.msra.mxu0 %v1691
        %1710 = vmatpush.msra.mxu0 %v1690
        %1711 = vmatpush.msra.mxu0 %v1689
        %1712 = vmatpush.msra.mxu0 %v1688
        %1713 = vmatpush.msra.mxu0 %v1687
        %1714 = vmatpush.msra.mxu0 %v1686
        %1715 = vmatpush.msra.mxu0 %v1685
        %1716 = vmatpush.msra.mxu0 %v1684
        %1717 = vmatmul.f32.gmra.mxu0 %v1683
        %v1718 = vpop.f32.mrf.mxu0
        %v1719 = vadd.f32 %v1700, %v1718
        %1720 = vdwg.mxu0
        %1721 = vst [vmem:[%s432] sm:$0x1] %v1719
        %s1722 = sand.u32 %s313, 1
        %s1723 = scalar_lea.sflag [#allocation7], %s1722
        %s1724 = sand.u32 %s313, 1
        %s1725 = scalar_lea.vmem [#allocation6], %s1724
        // Predicated region
        $region73: #{net_forward.1} parent=71 // pred_check
          %p1726 = pneg %p323
        $region74: #{net_forward.1} parent=71 // pred_check_branch
          %1728 = sbr.rel (%p1726) target = $region76
        $region75: #{net_forward.1} parent=71 // pred_region
          %1730 = vsyncadd %s1723, 0
          %s1731 = scalar_lea.hbm %s13, %s27
          %s1733 = sshll.u32 %s1725, 4
          %s1734 = int_to_ptr.vmem [resolvable:$true] %s1733
          %s1735 = sshll.u32 %s1731, 4
          %s1736 = int_to_ptr.hbm [resolvable:$true] %s1735
          %1738 = dma.vmem_to_hbm [thread:$0]  %s1734, 16, %s1736, %s1723
        $region76: #{net_forward.1} parent=71 // pred_fallthru
          _
      $region72: #{net_forward.1} parent=5 // pred_fallthru
        _
      %p1739 = scmp.le.s32.totalorder 2, %s22
      // Predicated region
      $region77: #{net_forward.1} parent=5 // pred_check
        %p1740 = pneg %p1739
      $region78: #{net_forward.1} parent=5 // pred_check_branch
        %1742 = sbr.rel (%p1740) target = $region80
      $region79: #{net_forward.1} parent=5 // pred_region
        %s1743 = ssub.s32 %s22, 2
        // Predicated region
        $region81: #{net_forward.1} parent=79 // pred_check
          %p1744 = pneg %p329
        $region82: #{net_forward.1} parent=79 // pred_check_branch
          %1746 = sbr.rel (%p1744) target = $region84
        $region83: #{net_forward.1} parent=79 // pred_region
          %s1747 = sand.u32 %s314, 1
          %s1748 = scalar_lea.sflag [#allocation7], %s1747
          %s1749 = sand.u32 %s314, 1
          %s1750 = scalar_lea.vmem [#allocation6], %s1749
          %1752 = dma.done %s1748, 16
        $region84: #{net_forward.1} parent=79 // pred_fallthru
          _
      $region80: #{net_forward.1} parent=5 // pred_fallthru
        _
    $region6: #{net_forward.1} parent=1 // loop_footer
      %s26 = sadd.s32 1, %s22
    $region7: #{net_forward.1} parent=1 // loop_footer_branch
      %21 = sbr.rel target = $region3
    $region8: #{net_forward.1} parent=1 // loop_exit
      _
    %1753 = vsyncpa [#allocation7], 1
    %s1754 = scalar_lea.sflag [#allocation7], 1
    %1755 = vsyncpa %s1754, 1

</llo_original>
